<compile_context>
chip_gen: v7x
topology: tpu7x:2x2x1
jax: 0.10.0
libtpu: 0.0.40
codegen_flags: <defaults>
</compile_context>

<pallas_src>
import functools
import math

import jax
import jax.numpy as jnp
from jax.experimental import pallas as pl
from jax.experimental.pallas import tpu as pltpu

_SQRT_HALF = 1.0 / math.sqrt(2.0)


# ----------------------------------------------------------------------------
# in-kernel math helpers
# ----------------------------------------------------------------------------
def _erf_approx(x):
    # Abramowitz & Stegun 7.1.26 (max abs err ~1.5e-7); exp + reciprocal on EUP.
    a1, a2, a3, a4, a5 = (0.254829592, -0.284496736, 1.421413741,
                          -1.453152027, 1.061405429)
    p = 0.3275911
    s = jnp.where(x >= 0.0, 1.0, -1.0)
    ax = jnp.abs(x)
    t = pl.reciprocal(1.0 + p * ax, approx=True)          # EUP slot, not VALU divide
    poly = ((((a5 * t + a4) * t + a3) * t + a2) * t + a1) * t
    return s * (1.0 - poly * jnp.exp(-ax * ax))


def _gelu_exact(x):
    # erf-based GELU, matching PyTorch nn.GELU() (exact) semantics.
    return 0.5 * x * (1.0 + _erf_approx(x * _SQRT_HALF))


def _mlp_core(x_bf16, gb1_f32, w1x_ref, w2_ref, b2_ref, hc):
    """fc1 (x part) + GELU + fc2; hidden dim processed in `hc`-lane chunks.

    gb1_f32 = g @ W1g + b1 (shape (1, H) f32) is the hoisted per-batch bias, so
    the reference's concat([g, x]) is never materialized and the g matmul is
    never redone per token tile."""
    tn = x_bf16.shape[0]
    hdim = w1x_ref.shape[1]
    out = w2_ref.shape[1]
    acc = jnp.zeros((tn, out), jnp.float32)
    for h0 in range(0, hdim, hc):                         # static unrolled chunk loop
        hs = min(hc, hdim - h0)
        h = jnp.dot(x_bf16, w1x_ref[:, h0:h0 + hs],
                    preferred_element_type=jnp.float32)
        h = h + gb1_f32[:, h0:h0 + hs]
        h = _gelu_exact(h)                                # hidden chunk stays on-chip
        acc = acc + jnp.dot(h.astype(jnp.bfloat16), w2_ref[h0:h0 + hs, :],
                            preferred_element_type=jnp.float32)
    return acc + b2_ref[...]


# ----------------------------------------------------------------------------
# Pallas kernels
# ----------------------------------------------------------------------------
def _fused_kernel(x_ref, w1x_ref, w1g_ref, b1_ref, w2_ref, b2_ref, o_ref, *, hc):
    """Whole forward for one batch when all tokens fit one tile:
    token-max -> gb1 = g@W1g + b1 -> fc1(x part) -> GELU -> fc2."""
    x_f32 = x_ref[0]                                      # (N, C)
    g = jnp.max(x_f32, axis=0, keepdims=True)             # (1, C)
    gb1 = jnp.dot(g.astype(jnp.bfloat16), w1g_ref[...],
                  preferred_element_type=jnp.float32) + b1_ref[...]
    o_ref[0] = _mlp_core(x_f32.astype(jnp.bfloat16), gb1,
                         w1x_ref, w2_ref, b2_ref, hc)


def _gbias_kernel(x_ref, w1g_ref, b1_ref, gb1_ref, gmax_sc):
    """Multi-tile stage 1: running token-max per batch, finalized into
    gb1 = max(x) @ W1g + b1 at the last token tile (g never hits HBM)."""
    t = pl.program_id(1)
    blk = jnp.max(x_ref[0], axis=0, keepdims=True)        # (1, C)

    @pl.when(t == 0)
    def _():
        gmax_sc[...] = blk

    @pl.when(t > 0)
    def _():
        gmax_sc[...] = jnp.maximum(gmax_sc[...], blk)

    @pl.when(t == pl.num_programs(1) - 1)
    def _():
        gb1_ref[0] = jnp.dot(gmax_sc[...].astype(jnp.bfloat16), w1g_ref[...],
                             preferred_element_type=jnp.float32) + b1_ref[...]


def _mlp_kernel(x_ref, gb1_ref, w1x_ref, w2_ref, b2_ref, o_ref, *, hc):
    """Multi-tile stage 2: per (batch, token-tile) fc1 + GELU + fc2 using the
    hoisted per-batch bias gb1."""
    o_ref[0] = _mlp_core(x_ref[0].astype(jnp.bfloat16), gb1_ref[0],
                         w1x_ref, w2_ref, b2_ref, hc)


# ----------------------------------------------------------------------------
# wrapper
# ----------------------------------------------------------------------------
def _pick_token_tile(n, cap=512):
    """Largest token tile: whole axis if it fits, else the biggest divisor that
    is a multiple of 8, else 0 (caller pads the token axis)."""
    if n <= cap:
        return n
    for t in range(cap, 7, -8):
        if n % t == 0:
            return t
    return 0


@functools.partial(jax.jit, static_argnames=("step",))
def simple_rebuild_fc_forward(rec_feature, params, step):
    B, N, C = rec_feature.shape
    H = params["w1x"].shape[1]
    OUT_PAD = params["w2"].shape[1]
    HC = min(H, 256)                                      # hidden-dim chunk (static)

    TN = _pick_token_tile(N)
    if TN == 0:                                           # awkward N: pad token axis
        TN = 256
        Np = ((N + TN - 1) // TN) * TN
        # large-negative pad never wins the token max; padded rows are discarded
        rec = jnp.pad(rec_feature, ((0, 0), (0, Np - N), (0, 0)),
                      constant_values=-1e30)
    else:
        Np, rec = N, rec_feature
    T = Np // TN

    if T == 1:
        # ---- single fused launch: max + fc1 + GELU + fc2 --------------------
        y = pl.pallas_call(
            functools.partial(_fused_kernel, hc=HC),
            out_shape=jax.ShapeDtypeStruct((B, Np, OUT_PAD), jnp.float32),
            grid=(B,),
            in_specs=[
                pl.BlockSpec((1, TN, C), lambda b: (b, 0, 0)),        # x (one batch)
                pl.BlockSpec((C, H), lambda b: (0, 0)),               # W1 (x part)
                pl.BlockSpec((C, H), lambda b: (0, 0)),               # W1 (g part)
                pl.BlockSpec((1, H), lambda b: (0, 0)),               # b1
                pl.BlockSpec((H, OUT_PAD), lambda b: (0, 0)),         # W2 (lane padded)
                pl.BlockSpec((1, OUT_PAD), lambda b: (0, 0)),         # b2 (lane padded)
            ],
            out_specs=pl.BlockSpec((1, TN, OUT_PAD), lambda b: (b, 0, 0)),
            compiler_params=pltpu.CompilerParams(
                dimension_semantics=("parallel",)),
        )(rec, params["w1x"], params["w1g"], params["b1"],
          params["w2"], params["b2"])
    else:
        # ---- stage 1: per-batch hoisted bias gb1 = max(x) @ W1g + b1 ---------
        gb1 = pl.pallas_call(
            _gbias_kernel,
            out_shape=jax.ShapeDtypeStruct((B, 1, H), jnp.float32),
            grid=(B, T),
            in_specs=[
                pl.BlockSpec((1, TN, C), lambda b, t: (b, t, 0)),
                pl.BlockSpec((C, H), lambda b, t: (0, 0)),
                pl.BlockSpec((1, H), lambda b, t: (0, 0)),
            ],
            out_specs=pl.BlockSpec((1, 1, H), lambda b, t: (b, 0, 0)),
            scratch_shapes=[pltpu.VMEM((1, C), jnp.float32)],
            compiler_params=pltpu.CompilerParams(
                dimension_semantics=("parallel", "arbitrary")),
        )(rec, params["w1g"], params["b1"])

        # ---- stage 2: fused fc1 + GELU + fc2 per (batch, token-tile) ---------
        y = pl.pallas_call(
            functools.partial(_mlp_kernel, hc=HC),
            out_shape=jax.ShapeDtypeStruct((B, Np, OUT_PAD), jnp.float32),
            grid=(B, T),
            in_specs=[
                pl.BlockSpec((1, TN, C), lambda b, t: (b, t, 0)),     # x tile
                pl.BlockSpec((1, 1, H), lambda b, t: (b, 0, 0)),      # gb1 (per batch)
                pl.BlockSpec((C, H), lambda b, t: (0, 0)),            # W1 (x part)
                pl.BlockSpec((H, OUT_PAD), lambda b, t: (0, 0)),      # W2 (lane padded)
                pl.BlockSpec((1, OUT_PAD), lambda b, t: (0, 0)),      # b2 (lane padded)
            ],
            out_specs=pl.BlockSpec((1, TN, OUT_PAD), lambda b, t: (b, t, 0)),
            compiler_params=pltpu.CompilerParams(
                dimension_semantics=("parallel", "parallel")),
        )(rec, gb1, params["w1x"], params["w2"], params["b2"])

    out_dim = step * 3
    return y[:, :N, :out_dim].reshape(B, N, step, 3)


# ----------------------------------------------------------------------------
# parameters (PyTorch-style Linear init) + plain-JAX reference
# ----------------------------------------------------------------------------
def init_simple_rebuild_fc(key, token_dim, hidden_dim, step):
    in_dims = 2 * token_dim                      # Mlp sees concat([g, x])
    out_dim = step * 3
    out_pad = ((out_dim + 127) // 128) * 128
    k1, k2, k3, k4 = jax.random.split(key, 4)

    lim1 = 1.0 / math.sqrt(in_dims)
    w1 = jax.random.uniform(k1, (in_dims, hidden_dim), jnp.float32, -lim1, lim1)
    b1 = jax.random.uniform(k2, (1, hidden_dim), jnp.float32, -lim1, lim1)
    lim2 = 1.0 / math.sqrt(hidden_dim)
    w2 = jax.random.uniform(k3, (hidden_dim, out_dim), jnp.float32, -lim2, lim2)
    b2 = jax.random.uniform(k4, (1, out_dim), jnp.float32, -lim2, lim2)

    # split fc1 along the virtual concat: rows [:C] act on g, rows [C:] on x
    w1g = w1[:token_dim]
    w1x = w1[token_dim:]
    # lane-dense output: zero-pad fc2 to a 128 multiple; wrapper slices back
    w2p = jnp.zeros((hidden_dim, out_pad), jnp.float32).at[:, :out_dim].set(w2)
    b2p = jnp.zeros((1, out_pad), jnp.float32).at[:, :out_dim].set(b2)

    params = dict(
        w1g=w1g.astype(jnp.bfloat16),
        w1x=w1x.astype(jnp.bfloat16),
        b1=b1,
        w2=w2p.astype(jnp.bfloat16),
        b2=b2p,
    )
    # f32 copies of the (bf16-rounded) weights for the plain-JAX reference
    ref = dict(
        w1=jnp.concatenate([w1g, w1x], 0).astype(jnp.bfloat16).astype(jnp.float32),
        b1=b1,
        w2=w2.astype(jnp.bfloat16).astype(jnp.float32),
        b2=b2,
    )
    return params, ref


def reference_forward(rec_feature, ref, step):
    """Plain-JAX mirror of SimpleRebuildFCLayer.forward (bf16 matmul operands
    to match the kernel's numerics apples-to-apples). Dropout p=0 -> identity."""
    B, N, C = rec_feature.shape
    g = jnp.max(rec_feature, axis=1)
    patch = jnp.concatenate(
        [jnp.broadcast_to(g[:, None, :], (B, N, C)), rec_feature], axis=-1)
    pb = patch.astype(jnp.bfloat16).astype(jnp.float32)
    h = pb @ ref["w1"] + ref["b1"]
    h = jax.nn.gelu(h, approximate=False)
    hb = h.astype(jnp.bfloat16).astype(jnp.float32)
    y = hb @ ref["w2"] + ref["b2"]
    return y.reshape(B, N, step, 3)


# ----------------------------------------------------------------------------
if __name__ == "__main__":
    hidden, step = 512, 4
    key = jax.random.PRNGKey(0)
    kx, kp, kx2 = jax.random.split(key, 3)

    # ---- shipped FracFormer decode-head shape: fused single-launch path ------
    B, N, C = 2, 16, 48
    rec_feature = jax.random.normal(kx, (B, N, C), jnp.float32)
    params, ref_params = init_simple_rebuild_fc(kp, C, hidden, step)

    out = simple_rebuild_fc_forward(rec_feature, params, step)
    jax.block_until_ready(out)
    assert out.shape == (B, N, step, 3)
    assert out.shape[1] == rec_feature.shape[1]          # mirrors the PyTorch assert
    ref = reference_forward(rec_feature, ref_params, step)
    err1 = float(jnp.max(jnp.abs(out - ref)))
    assert jnp.allclose(out, ref, rtol=2e-2, atol=2e-2), f"fused path err {err1}"

    # ---- larger token count: exercises the two-stage multi-tile path ---------
    N2 = 1024
    rec_feature2 = jax.random.normal(kx2, (B, N2, C), jnp.float32)
    out2 = simple_rebuild_fc_forward(rec_feature2, params, step)
    jax.block_until_ready(out2)
    assert out2.shape == (B, N2, step, 3)
    ref2 = reference_forward(rec_feature2, ref_params, step)
    err2 = float(jnp.max(jnp.abs(out2 - ref2)))
    assert jnp.allclose(out2, ref2, rtol=2e-2, atol=2e-2), f"tiled path err {err2}"

    print("KERNEL_OK")
</pallas_src>

<mosaic_0001>
module attributes {stable_mosaic.version = 11 : i64} {
  func.func @_fused_kernel(%arg0: i32, %arg1: memref<1x16x48xf32, #tpu.memory_space<vmem>>, %arg2: memref<48x512xbf16, #tpu.memory_space<vmem>>, %arg3: memref<48x512xbf16, #tpu.memory_space<vmem>>, %arg4: memref<1x512xf32, #tpu.memory_space<vmem>>, %arg5: memref<512x128xbf16, #tpu.memory_space<vmem>>, %arg6: memref<1x128xf32, #tpu.memory_space<vmem>>, %arg7: memref<1x16x128xf32, #tpu.memory_space<vmem>>) attributes {dimension_semantics = [#tpu.dimension_semantics<parallel>], iteration_bounds = array<i64: 2>, scalar_prefetch = 0 : i64, scratch_operands = 0 : i64, tpu.core_type = #tpu.core_type<tc>, window_params = [{transform_indices = @transform_0, window_bounds = array<i64: 1, 16, 48>}, {pipeline_mode = #tpu.pipeline_mode<synchronous>, transform_indices = @transform_1, window_bounds = array<i64: 48, 512>}, {pipeline_mode = #tpu.pipeline_mode<synchronous>, transform_indices = @transform_2, window_bounds = array<i64: 48, 512>}, {pipeline_mode = #tpu.pipeline_mode<synchronous>, transform_indices = @transform_3, window_bounds = array<i64: 1, 512>}, {pipeline_mode = #tpu.pipeline_mode<synchronous>, transform_indices = @transform_4, window_bounds = array<i64: 512, 128>}, {pipeline_mode = #tpu.pipeline_mode<synchronous>, transform_indices = @transform_5, window_bounds = array<i64: 1, 128>}, {transform_indices = @transform_6, window_bounds = array<i64: 1, 16, 128>}]} {
    %c0 = arith.constant 0 : index
    %c0_0 = arith.constant 0 : index
    %c0_1 = arith.constant 0 : index
    %0 = vector.load %arg1[%c0, %c0_0, %c0_1] : memref<1x16x48xf32, #tpu.memory_space<vmem>>, vector<1x16x48xf32>
    %1 = vector.shape_cast %0 : vector<1x16x48xf32> to vector<16x48xf32>
    %cst = arith.constant dense<0xFF800000> : vector<48xf32>
    %2 = vector.multi_reduction <maximumf>, %1, %cst [0] : vector<16x48xf32> to vector<48xf32>
    %3 = vector.shape_cast %2 : vector<48xf32> to vector<1x48xf32>
    %4 = arith.truncf %3 : vector<1x48xf32> to vector<1x48xbf16>
    %c0_2 = arith.constant 0 : index
    %c0_3 = arith.constant 0 : index
    %5 = vector.load %arg3[%c0_2, %c0_3] : memref<48x512xbf16, #tpu.memory_space<vmem>>, vector<48x512xbf16>
    %cst_4 = arith.constant dense<0.000000e+00> : vector<1x512xf32>
    %6 = tpu.matmul %4, %5, %cst_4 {dimension_numbers = #tpu.dot_dimension_numbers<[1], [0], [0], [1], [0, 0, 1, 1], [], []>} : vector<1x48xbf16>, vector<48x512xbf16>, vector<1x512xf32> -> vector<1x512xf32>
    %c0_5 = arith.constant 0 : index
    %c0_6 = arith.constant 0 : index
    %7 = vector.load %arg4[%c0_5, %c0_6] : memref<1x512xf32, #tpu.memory_space<vmem>>, vector<1x512xf32>
    %8 = arith.addf %6, %7 : vector<1x512xf32>
    %9 = arith.truncf %1 : vector<16x48xf32> to vector<16x48xbf16>
    %cst_7 = arith.constant 0.000000e+00 : f32
    %10 = vector.broadcast %cst_7 : f32 to vector<16x128xf32>
    %c0_8 = arith.constant 0 : index
    %c0_9 = arith.constant 0 : index
    %11 = vector.load %arg2[%c0_8, %c0_9] : memref<48x512xbf16, #tpu.memory_space<vmem>>, vector<48x256xbf16>
    %cst_10 = arith.constant dense<0.000000e+00> : vector<16x256xf32>
    %12 = tpu.matmul %9, %11, %cst_10 {dimension_numbers = #tpu.dot_dimension_numbers<[1], [0], [0], [1], [0, 0, 1, 1], [], []>} : vector<16x48xbf16>, vector<48x256xbf16>, vector<16x256xf32> -> vector<16x256xf32>
    %13 = vector.extract_strided_slice %8 {offsets = [0, 0], sizes = [1, 256], strides = [1, 1]} : vector<1x512xf32> to vector<1x256xf32>
    %14 = vector.broadcast %13 : vector<1x256xf32> to vector<16x256xf32>
    %15 = arith.addf %12, %14 : vector<16x256xf32>
    %cst_11 = arith.constant 5.000000e-01 : f32
    %16 = vector.broadcast %cst_11 : f32 to vector<16x256xf32>
    %17 = arith.mulf %16, %15 : vector<16x256xf32>
    %cst_12 = arith.constant 0.707106769 : f32
    %18 = vector.broadcast %cst_12 : f32 to vector<16x256xf32>
    %19 = arith.mulf %15, %18 : vector<16x256xf32>
    %cst_13 = arith.constant 0.000000e+00 : f32
    %20 = vector.broadcast %cst_13 : f32 to vector<16x256xf32>
    %21 = arith.cmpf oge, %19, %20 : vector<16x256xf32>
    %cst_14 = arith.constant 1.000000e+00 : f32
    %cst_15 = arith.constant -1.000000e+00 : f32
    %22 = vector.broadcast %cst_14 : f32 to vector<16x256xf32>
    %23 = vector.broadcast %cst_15 : f32 to vector<16x256xf32>
    %24 = arith.select %21, %22, %23 : vector<16x256xi1>, vector<16x256xf32>
    %25 = math.absf %19 : vector<16x256xf32>
    %cst_16 = arith.constant 0.327591091 : f32
    %26 = vector.broadcast %cst_16 : f32 to vector<16x256xf32>
    %27 = arith.mulf %26, %25 : vector<16x256xf32>
    %cst_17 = arith.constant 1.000000e+00 : f32
    %28 = vector.broadcast %cst_17 : f32 to vector<16x256xf32>
    %29 = arith.addf %28, %27 : vector<16x256xf32>
    %30 = tpu.reciprocal %29 {approx = true} : vector<16x256xf32> -> vector<16x256xf32>
    %cst_18 = arith.constant 1.06140542 : f32
    %31 = vector.broadcast %cst_18 : f32 to vector<16x256xf32>
    %32 = arith.mulf %31, %30 : vector<16x256xf32>
    %cst_19 = arith.constant -1.45315206 : f32
    %33 = vector.broadcast %cst_19 : f32 to vector<16x256xf32>
    %34 = arith.addf %32, %33 : vector<16x256xf32>
    %35 = arith.mulf %34, %30 : vector<16x256xf32>
    %cst_20 = arith.constant 1.42141378 : f32
    %36 = vector.broadcast %cst_20 : f32 to vector<16x256xf32>
    %37 = arith.addf %35, %36 : vector<16x256xf32>
    %38 = arith.mulf %37, %30 : vector<16x256xf32>
    %cst_21 = arith.constant -0.284496725 : f32
    %39 = vector.broadcast %cst_21 : f32 to vector<16x256xf32>
    %40 = arith.addf %38, %39 : vector<16x256xf32>
    %41 = arith.mulf %40, %30 : vector<16x256xf32>
    %cst_22 = arith.constant 0.254829586 : f32
    %42 = vector.broadcast %cst_22 : f32 to vector<16x256xf32>
    %43 = arith.addf %41, %42 : vector<16x256xf32>
    %44 = arith.mulf %43, %30 : vector<16x256xf32>
    %cst_23 = arith.constant 0.000000e+00 : f32
    %45 = vector.broadcast %cst_23 : f32 to vector<16x256xf32>
    %46 = arith.subf %45, %25 : vector<16x256xf32>
    %47 = arith.mulf %46, %25 : vector<16x256xf32>
    %48 = math.exp %47 : vector<16x256xf32>
    %49 = arith.mulf %44, %48 : vector<16x256xf32>
    %cst_24 = arith.constant 1.000000e+00 : f32
    %50 = vector.broadcast %cst_24 : f32 to vector<16x256xf32>
    %51 = arith.subf %50, %49 : vector<16x256xf32>
    %52 = arith.mulf %24, %51 : vector<16x256xf32>
    %cst_25 = arith.constant 1.000000e+00 : f32
    %53 = vector.broadcast %cst_25 : f32 to vector<16x256xf32>
    %54 = arith.addf %53, %52 : vector<16x256xf32>
    %55 = arith.mulf %17, %54 : vector<16x256xf32>
    %56 = arith.truncf %55 : vector<16x256xf32> to vector<16x256xbf16>
    %c0_26 = arith.constant 0 : index
    %c0_27 = arith.constant 0 : index
    %57 = vector.load %arg5[%c0_26, %c0_27] : memref<512x128xbf16, #tpu.memory_space<vmem>>, vector<256x128xbf16>
    %cst_28 = arith.constant dense<0.000000e+00> : vector<16x128xf32>
    %58 = tpu.matmul %56, %57, %cst_28 {dimension_numbers = #tpu.dot_dimension_numbers<[1], [0], [0], [1], [0, 0, 1, 1], [], []>} : vector<16x256xbf16>, vector<256x128xbf16>, vector<16x128xf32> -> vector<16x128xf32>
    %59 = arith.addf %10, %58 : vector<16x128xf32>
    %c0_29 = arith.constant 0 : index
    %c256 = arith.constant 256 : index
    %60 = vector.load %arg2[%c0_29, %c256] : memref<48x512xbf16, #tpu.memory_space<vmem>>, vector<48x256xbf16>
    %cst_30 = arith.constant dense<0.000000e+00> : vector<16x256xf32>
    %61 = tpu.matmul %9, %60, %cst_30 {dimension_numbers = #tpu.dot_dimension_numbers<[1], [0], [0], [1], [0, 0, 1, 1], [], []>} : vector<16x48xbf16>, vector<48x256xbf16>, vector<16x256xf32> -> vector<16x256xf32>
    %62 = vector.extract_strided_slice %8 {offsets = [0, 256], sizes = [1, 256], strides = [1, 1]} : vector<1x512xf32> to vector<1x256xf32>
    %63 = vector.broadcast %62 : vector<1x256xf32> to vector<16x256xf32>
    %64 = arith.addf %61, %63 : vector<16x256xf32>
    %cst_31 = arith.constant 5.000000e-01 : f32
    %65 = vector.broadcast %cst_31 : f32 to vector<16x256xf32>
    %66 = arith.mulf %65, %64 : vector<16x256xf32>
    %cst_32 = arith.constant 0.707106769 : f32
    %67 = vector.broadcast %cst_32 : f32 to vector<16x256xf32>
    %68 = arith.mulf %64, %67 : vector<16x256xf32>
    %cst_33 = arith.constant 0.000000e+00 : f32
    %69 = vector.broadcast %cst_33 : f32 to vector<16x256xf32>
    %70 = arith.cmpf oge, %68, %69 : vector<16x256xf32>
    %cst_34 = arith.constant 1.000000e+00 : f32
    %cst_35 = arith.constant -1.000000e+00 : f32
    %71 = vector.broadcast %cst_34 : f32 to vector<16x256xf32>
    %72 = vector.broadcast %cst_35 : f32 to vector<16x256xf32>
    %73 = arith.select %70, %71, %72 : vector<16x256xi1>, vector<16x256xf32>
    %74 = math.absf %68 : vector<16x256xf32>
    %cst_36 = arith.constant 0.327591091 : f32
    %75 = vector.broadcast %cst_36 : f32 to vector<16x256xf32>
    %76 = arith.mulf %75, %74 : vector<16x256xf32>
    %cst_37 = arith.constant 1.000000e+00 : f32
    %77 = vector.broadcast %cst_37 : f32 to vector<16x256xf32>
    %78 = arith.addf %77, %76 : vector<16x256xf32>
    %79 = tpu.reciprocal %78 {approx = true} : vector<16x256xf32> -> vector<16x256xf32>
    %cst_38 = arith.constant 1.06140542 : f32
    %80 = vector.broadcast %cst_38 : f32 to vector<16x256xf32>
    %81 = arith.mulf %80, %79 : vector<16x256xf32>
    %cst_39 = arith.constant -1.45315206 : f32
    %82 = vector.broadcast %cst_39 : f32 to vector<16x256xf32>
    %83 = arith.addf %81, %82 : vector<16x256xf32>
    %84 = arith.mulf %83, %79 : vector<16x256xf32>
    %cst_40 = arith.constant 1.42141378 : f32
    %85 = vector.broadcast %cst_40 : f32 to vector<16x256xf32>
    %86 = arith.addf %84, %85 : vector<16x256xf32>
    %87 = arith.mulf %86, %79 : vector<16x256xf32>
    %cst_41 = arith.constant -0.284496725 : f32
    %88 = vector.broadcast %cst_41 : f32 to vector<16x256xf32>
    %89 = arith.addf %87, %88 : vector<16x256xf32>
    %90 = arith.mulf %89, %79 : vector<16x256xf32>
    %cst_42 = arith.constant 0.254829586 : f32
    %91 = vector.broadcast %cst_42 : f32 to vector<16x256xf32>
    %92 = arith.addf %90, %91 : vector<16x256xf32>
    %93 = arith.mulf %92, %79 : vector<16x256xf32>
    %cst_43 = arith.constant 0.000000e+00 : f32
    %94 = vector.broadcast %cst_43 : f32 to vector<16x256xf32>
    %95 = arith.subf %94, %74 : vector<16x256xf32>
    %96 = arith.mulf %95, %74 : vector<16x256xf32>
    %97 = math.exp %96 : vector<16x256xf32>
    %98 = arith.mulf %93, %97 : vector<16x256xf32>
    %cst_44 = arith.constant 1.000000e+00 : f32
    %99 = vector.broadcast %cst_44 : f32 to vector<16x256xf32>
    %100 = arith.subf %99, %98 : vector<16x256xf32>
    %101 = arith.mulf %73, %100 : vector<16x256xf32>
    %cst_45 = arith.constant 1.000000e+00 : f32
    %102 = vector.broadcast %cst_45 : f32 to vector<16x256xf32>
    %103 = arith.addf %102, %101 : vector<16x256xf32>
    %104 = arith.mulf %66, %103 : vector<16x256xf32>
    %105 = arith.truncf %104 : vector<16x256xf32> to vector<16x256xbf16>
    %c256_46 = arith.constant 256 : index
    %c0_47 = arith.constant 0 : index
    %106 = vector.load %arg5[%c256_46, %c0_47] : memref<512x128xbf16, #tpu.memory_space<vmem>>, vector<256x128xbf16>
    %cst_48 = arith.constant dense<0.000000e+00> : vector<16x128xf32>
    %107 = tpu.matmul %105, %106, %cst_48 {dimension_numbers = #tpu.dot_dimension_numbers<[1], [0], [0], [1], [0, 0, 1, 1], [], []>} : vector<16x256xbf16>, vector<256x128xbf16>, vector<16x128xf32> -> vector<16x128xf32>
    %108 = arith.addf %59, %107 : vector<16x128xf32>
    %c0_49 = arith.constant 0 : index
    %c0_50 = arith.constant 0 : index
    %109 = vector.load %arg6[%c0_49, %c0_50] : memref<1x128xf32, #tpu.memory_space<vmem>>, vector<1x128xf32>
    %110 = vector.broadcast %109 : vector<1x128xf32> to vector<16x128xf32>
    %111 = arith.addf %108, %110 : vector<16x128xf32>
    %c0_51 = arith.constant 0 : index
    %c0_52 = arith.constant 0 : index
    %c0_53 = arith.constant 0 : index
    %112 = vector.load %arg7[%c0_51, %c0_52, %c0_53] : memref<1x16x128xf32, #tpu.memory_space<vmem>>, vector<1x16x128xf32>
    %113 = vector.shape_cast %112 : vector<1x16x128xf32> to vector<16x128xf32>
    %114 = vector.shape_cast %111 : vector<16x128xf32> to vector<1x16x128xf32>
    tpu.vector_store %arg7[%c0_51, %c0_52, %c0_53], %114 {strides = array<i32>} : memref<1x16x128xf32, #tpu.memory_space<vmem>>, vector<1x16x128xf32>,
    return
  }
  func.func @transform_0(%arg0: i32) -> (i32, i32, i32) {
    %c0_i32 = arith.constant 0 : i32
    %c0_i32_0 = arith.constant 0 : i32
    %c0_i32_1 = arith.constant 0 : i32
    return %arg0, %c0_i32, %c0_i32_0 : i32, i32, i32
  }
  func.func @transform_1(%arg0: i32) -> (i32, i32) {
    %c0_i32 = arith.constant 0 : i32
    %c0_i32_0 = arith.constant 0 : i32
    %c0_i32_1 = arith.constant 0 : i32
    return %c0_i32, %c0_i32_0 : i32, i32
  }
  func.func @transform_2(%arg0: i32) -> (i32, i32) {
    %c0_i32 = arith.constant 0 : i32
    %c0_i32_0 = arith.constant 0 : i32
    %c0_i32_1 = arith.constant 0 : i32
    return %c0_i32, %c0_i32_0 : i32, i32
  }
  func.func @transform_3(%arg0: i32) -> (i32, i32) {
    %c0_i32 = arith.constant 0 : i32
    %c0_i32_0 = arith.constant 0 : i32
    %c0_i32_1 = arith.constant 0 : i32
    return %c0_i32, %c0_i32_0 : i32, i32
  }
  func.func @transform_4(%arg0: i32) -> (i32, i32) {
    %c0_i32 = arith.constant 0 : i32
    %c0_i32_0 = arith.constant 0 : i32
    %c0_i32_1 = arith.constant 0 : i32
    return %c0_i32, %c0_i32_0 : i32, i32
  }
  func.func @transform_5(%arg0: i32) -> (i32, i32) {
    %c0_i32 = arith.constant 0 : i32
    %c0_i32_0 = arith.constant 0 : i32
    %c0_i32_1 = arith.constant 0 : i32
    return %c0_i32, %c0_i32_0 : i32, i32
  }
  func.func @transform_6(%arg0: i32) -> (i32, i32, i32) {
    %c0_i32 = arith.constant 0 : i32
    %c0_i32_0 = arith.constant 0 : i32
    %c0_i32_1 = arith.constant 0 : i32
    return %arg0, %c0_i32, %c0_i32_0 : i32, i32, i32
  }
}

</mosaic_0001>

<llo_original>
// kernel: simple_rebuild_fc_forward.1
$region0: #{simple_rebuild_fc_forward.1}
  #allocation0 [shape = 'u32[]', space=smem, size = 0x4, offset = 0x4, fixed_abs, tag = 'smem constant byte address 0x4 - core index']
  #allocation1 [shape = 'u32[144,128]{1,0:T(1,128)}', space=vmem, size = 0x12000, scoped, tag = 'internal scratch']
  %s0 = inlined_call_operand.hbm [shape: f32[2,16,48], index: 0, kind: input, shape index: {}]
  %s1 = inlined_call_operand.hbm [shape: bf16[48,512], index: 1, kind: input, shape index: {}]
  %s2 = inlined_call_operand.hbm [shape: bf16[48,512], index: 2, kind: input, shape index: {}]
  %s3 = inlined_call_operand.hbm [shape: f32[1,512], index: 3, kind: input, shape index: {}]
  %s4 = inlined_call_operand.hbm [shape: bf16[512,128], index: 4, kind: input, shape index: {}]
  %s5 = inlined_call_operand.vmem [shape: f32[1,128], index: 5, kind: input, shape index: {}]
  %s6 = inlined_call_operand.vmem [shape: f32[2,16,128], index: 6, kind: output, shape index: {}]
  %s7 = sld [smem:[#allocation0]]
  $region77: #{simple_rebuild_fc_forward.1} parent=0
    _
  %s9 = ssub.s32 1, %s7
  %s10 = scalar_select 0, %s9, %s7
  $region1: #{simple_rebuild_fc_forward.1} parent=0
    #allocation2 [shape = 'u8[16384]{0}', space=vmem, size = 0x4000, scoped, tag = 'input window, operand 0']
    #allocation3 [shape = 's32[2]{0}', space=sflag, size = 0x8, scoped, tag = 'scoped memory for simple_rebuild_fc_forward.1']
    #allocation4 [shape = 'u8[49152]{0}', space=vmem, size = 0xc000, scoped, tag = 'input window, operand 1, single buffered']
    #allocation5 [shape = 's32[1]{0}', space=sflag, size = 0x4, scoped, tag = 'scoped memory for simple_rebuild_fc_forward.1']
    #allocation6 [shape = 'u8[49152]{0}', space=vmem, size = 0xc000, scoped, tag = 'input window, operand 2, single buffered']
    #allocation7 [shape = 'u8[2048]{0}', space=vmem, size = 0x800, scoped, tag = 'input window, operand 3, single buffered']
    #allocation8 [shape = 's32[1]{0}', space=sflag, size = 0x4, scoped, tag = 'scoped memory for simple_rebuild_fc_forward.1']
    #allocation9 [shape = 'u8[131072]{0}', space=vmem, size = 0x20000, scoped, tag = 'input window, operand 4, single buffered']
    %11 = vsyncpa [#allocation3], 0
    %s12 = scalar_lea.sflag [#allocation3], 1
    %13 = vsyncpa %s12, 0
    %14 = vsyncpa [#allocation5], 0
    %15 = vsyncpa [#allocation8], 0
    loop: start=0, step=1, limit=4
    $region2: #{simple_rebuild_fc_forward.1} parent=1 // loop_pre_header
      _
    $region3: #{simple_rebuild_fc_forward.1} parent=1 // loop_header
      %s17 = sphi 0, %s21
      %p18 = scmp.ge.s32.totalorder %s17, 4
      %s27 = sphi 0, %s29
      %s30 = sphi 0, %s27
      %s31 = sphi 0, %s30
      %s47 = sphi 0, %s31
      %s51 = sphi 0, %s51
      %s53 = sphi 0, %s51
      %s54 = sphi 0, %s53
      %s68 = sphi 0, %s54
      %s72 = sphi 0, %s72
      %s74 = sphi 0, %s72
      %s75 = sphi 0, %s74
      %s89 = sphi 0, %s75
      %s93 = sphi 0, %s93
      %s95 = sphi 0, %s93
      %s96 = sphi 0, %s95
      %s110 = sphi 0, %s96
      %s114 = sphi 0, %s114
      %s116 = sphi 0, %s114
      %s117 = sphi 0, %s116
      %s131 = sphi 0, %s117
      %s135 = sphi 0, %s135
      %s137 = sphi 0, %s135
      %s138 = sphi 0, %s137
      %s152 = sphi 0, %s138
      %s158 = sphi 0, %s160
      %s161 = sphi 0, %s158
      %s162 = sphi 0, %s161
      %s178 = sphi 0, %s162
    $region4: #{simple_rebuild_fc_forward.1} parent=1 // loop_header_branch
      %20 = sbr.rel (%p18) target = $region8
    $region5: #{simple_rebuild_fc_forward.1} parent=1 // loop_body
      %s22 = ssub.s32 %s17, 1
      %s23 = ssub.s32 %s17, 2
      %s24 = sadd.s32 %s17, 1
      %s25 = ssub.s32 %s17, %s24
      %p26 = scmp.eq.s32.totalorder %s25, 0
      %s28 = sadd.s32 %s27, 1
      %s29 = scalar_select %p26, %s27, %s28
      %p32 = pneg %p26
      %p33 = scmp.eq.s32.totalorder %s17, 1
      %p34 = por %p32, %p33
      %p35 = scmp.ne.s32.totalorder %s27, %s30
      %p36 = scmp.eq.s32.totalorder %s17, 0
      %p37 = por %p35, %p36
      %p38 = scmp.ne.s32.totalorder %s27, %s30
      %p39 = scmp.eq.s32.totalorder %s22, 1
      %p40 = por %p38, %p39
      %p41 = scmp.ne.s32.totalorder %s30, %s31
      %p42 = scmp.eq.s32.totalorder %s22, 0
      %p43 = por %p41, %p42
      %p44 = scmp.ne.s32.totalorder %s30, %s31
      %p45 = scmp.eq.s32.totalorder %s23, 1
      %p46 = por %p44, %p45
      %p48 = scmp.ne.s32.totalorder %s31, %s47
      %p49 = scmp.eq.s32.totalorder %s23, 0
      %p50 = por %p48, %p49
      %s52 = sadd.s32 %s51, 1
      %p55 = scmp.eq.s32.totalorder %s17, 1
      %p56 = scmp.ne.s32.totalorder %s51, %s53
      %p57 = scmp.eq.s32.totalorder %s17, 0
      %p58 = por %p56, %p57
      %p59 = scmp.ne.s32.totalorder %s51, %s53
      %p60 = scmp.eq.s32.totalorder %s22, 1
      %p61 = por %p59, %p60
      %p62 = scmp.ne.s32.totalorder %s53, %s54
      %p63 = scmp.eq.s32.totalorder %s22, 0
      %p64 = por %p62, %p63
      %p65 = scmp.ne.s32.totalorder %s53, %s54
      %p66 = scmp.eq.s32.totalorder %s23, 1
      %p67 = por %p65, %p66
      %p69 = scmp.ne.s32.totalorder %s54, %s68
      %p70 = scmp.eq.s32.totalorder %s23, 0
      %p71 = por %p69, %p70
      %s73 = sadd.s32 %s72, 1
      %p76 = scmp.eq.s32.totalorder %s17, 1
      %p77 = scmp.ne.s32.totalorder %s72, %s74
      %p78 = scmp.eq.s32.totalorder %s17, 0
      %p79 = por %p77, %p78
      %p80 = scmp.ne.s32.totalorder %s72, %s74
      %p81 = scmp.eq.s32.totalorder %s22, 1
      %p82 = por %p80, %p81
      %p83 = scmp.ne.s32.totalorder %s74, %s75
      %p84 = scmp.eq.s32.totalorder %s22, 0
      %p85 = por %p83, %p84
      %p86 = scmp.ne.s32.totalorder %s74, %s75
      %p87 = scmp.eq.s32.totalorder %s23, 1
      %p88 = por %p86, %p87
      %p90 = scmp.ne.s32.totalorder %s75, %s89
      %p91 = scmp.eq.s32.totalorder %s23, 0
      %p92 = por %p90, %p91
      %s94 = sadd.s32 %s93, 1
      %p97 = scmp.eq.s32.totalorder %s17, 1
      %p98 = scmp.ne.s32.totalorder %s93, %s95
      %p99 = scmp.eq.s32.totalorder %s17, 0
      %p100 = por %p98, %p99
      %p101 = scmp.ne.s32.totalorder %s93, %s95
      %p102 = scmp.eq.s32.totalorder %s22, 1
      %p103 = por %p101, %p102
      %p104 = scmp.ne.s32.totalorder %s95, %s96
      %p105 = scmp.eq.s32.totalorder %s22, 0
      %p106 = por %p104, %p105
      %p107 = scmp.ne.s32.totalorder %s95, %s96
      %p108 = scmp.eq.s32.totalorder %s23, 1
      %p109 = por %p107, %p108
      %p111 = scmp.ne.s32.totalorder %s96, %s110
      %p112 = scmp.eq.s32.totalorder %s23, 0
      %p113 = por %p111, %p112
      %s115 = sadd.s32 %s114, 1
      %p118 = scmp.eq.s32.totalorder %s17, 1
      %p119 = scmp.ne.s32.totalorder %s114, %s116
      %p120 = scmp.eq.s32.totalorder %s17, 0
      %p121 = por %p119, %p120
      %p122 = scmp.ne.s32.totalorder %s114, %s116
      %p123 = scmp.eq.s32.totalorder %s22, 1
      %p124 = por %p122, %p123
      %p125 = scmp.ne.s32.totalorder %s116, %s117
      %p126 = scmp.eq.s32.totalorder %s22, 0
      %p127 = por %p125, %p126
      %p128 = scmp.ne.s32.totalorder %s116, %s117
      %p129 = scmp.eq.s32.totalorder %s23, 1
      %p130 = por %p128, %p129
      %p132 = scmp.ne.s32.totalorder %s117, %s131
      %p133 = scmp.eq.s32.totalorder %s23, 0
      %p134 = por %p132, %p133
      %s136 = sadd.s32 %s135, 1
      %p139 = scmp.eq.s32.totalorder %s17, 1
      %p140 = scmp.ne.s32.totalorder %s135, %s137
      %p141 = scmp.eq.s32.totalorder %s17, 0
      %p142 = por %p140, %p141
      %p143 = scmp.ne.s32.totalorder %s135, %s137
      %p144 = scmp.eq.s32.totalorder %s22, 1
      %p145 = por %p143, %p144
      %p146 = scmp.ne.s32.totalorder %s137, %s138
      %p147 = scmp.eq.s32.totalorder %s22, 0
      %p148 = por %p146, %p147
      %p149 = scmp.ne.s32.totalorder %s137, %s138
      %p150 = scmp.eq.s32.totalorder %s23, 1
      %p151 = por %p149, %p150
      %p153 = scmp.ne.s32.totalorder %s138, %s152
      %p154 = scmp.eq.s32.totalorder %s23, 0
      %p155 = por %p153, %p154
      %s156 = ssub.s32 %s17, %s24
      %p157 = scmp.eq.s32.totalorder %s156, 0
      %s159 = sadd.s32 %s158, 1
      %s160 = scalar_select %p157, %s158, %s159
      %p163 = pneg %p157
      %p164 = scmp.eq.s32.totalorder %s17, 1
      %p165 = por %p163, %p164
      %p166 = scmp.ne.s32.totalorder %s158, %s161
      %p167 = scmp.eq.s32.totalorder %s17, 0
      %p168 = por %p166, %p167
      %p169 = scmp.ne.s32.totalorder %s158, %s161
      %p170 = scmp.eq.s32.totalorder %s22, 1
      %p171 = por %p169, %p170
      %p172 = scmp.ne.s32.totalorder %s161, %s162
      %p173 = scmp.eq.s32.totalorder %s22, 0
      %p174 = por %p172, %p173
      %p175 = scmp.ne.s32.totalorder %s161, %s162
      %p176 = scmp.eq.s32.totalorder %s23, 1
      %p177 = por %p175, %p176
      %p179 = scmp.ne.s32.totalorder %s162, %s178
      %p180 = scmp.eq.s32.totalorder %s23, 0
      %p181 = por %p179, %p180
      %p182 = scmp.le.s32.totalorder 1, %s17
      %p183 = scmp.lt.s32.totalorder %s17, 3
      %p184 = pnand %p182, %p183
      %p185 = pneg %p184
      // Predicated region
      $region9: #{simple_rebuild_fc_forward.1} parent=5 // pred_check
        _
      $region10: #{simple_rebuild_fc_forward.1} parent=5 // pred_check_branch
        %187 = sbr.rel (%p184) target = $region12
      $region11: #{simple_rebuild_fc_forward.1} parent=5 // pred_region
        %s188 = ssub.s32 %s17, 1
        // Predicated region
        $region13: #{simple_rebuild_fc_forward.1} parent=11 // pred_check
          %p189 = pneg %p64
        $region14: #{simple_rebuild_fc_forward.1} parent=11 // pred_check_branch
          %191 = sbr.rel (%p189) target = $region16
        $region15: #{simple_rebuild_fc_forward.1} parent=11 // pred_region
          %s193 = ssub.s32 1536, 1536
          %194 = vsyncadd [#allocation5], %s193
          %s195 = sshll.u32 [#allocation4], 4
          %s196 = int_to_ptr.vmem [resolvable:$true] %s195
          %201 = dma.hbm_to_vmem [thread:$0]  %s1, 1536, %s196, [#allocation5], 256, 256, 16
        $region16: #{simple_rebuild_fc_forward.1} parent=11 // pred_fallthru
          _
        // Predicated region
        $region17: #{simple_rebuild_fc_forward.1} parent=11 // pred_check
          %p202 = pneg %p85
        $region18: #{simple_rebuild_fc_forward.1} parent=11 // pred_check_branch
          %204 = sbr.rel (%p202) target = $region20
        $region19: #{simple_rebuild_fc_forward.1} parent=11 // pred_region
          %s206 = ssub.s32 1536, 1536
          %207 = vsyncadd [#allocation5], %s206
          %s208 = sshll.u32 [#allocation6], 4
          %s209 = int_to_ptr.vmem [resolvable:$true] %s208
          %214 = dma.hbm_to_vmem [thread:$0]  %s2, 1536, %s209, [#allocation5], 256, 256, 16
        $region20: #{simple_rebuild_fc_forward.1} parent=11 // pred_fallthru
          _
        // Predicated region
        $region21: #{simple_rebuild_fc_forward.1} parent=11 // pred_check
          %p215 = pneg %p106
        $region22: #{simple_rebuild_fc_forward.1} parent=11 // pred_check_branch
          %217 = sbr.rel (%p215) target = $region24
        $region23: #{simple_rebuild_fc_forward.1} parent=11 // pred_region
          %s219 = ssub.s32 64, 64
          %220 = vsyncadd [#allocation8], %s219
          %s222 = sshll.u32 [#allocation7], 4
          %s223 = int_to_ptr.vmem [resolvable:$true] %s222
          %225 = dma.hbm_to_vmem [thread:$0]  %s3, 64, %s223, [#allocation8]
        $region24: #{simple_rebuild_fc_forward.1} parent=11 // pred_fallthru
          _
        // Predicated region
        $region25: #{simple_rebuild_fc_forward.1} parent=11 // pred_check
          %p226 = pneg %p127
        $region26: #{simple_rebuild_fc_forward.1} parent=11 // pred_check_branch
          %228 = sbr.rel (%p226) target = $region28
        $region27: #{simple_rebuild_fc_forward.1} parent=11 // pred_region
          %s230 = ssub.s32 4096, 4096
          %231 = vsyncadd [#allocation8], %s230
          %s232 = sshll.u32 [#allocation9], 4
          %s233 = int_to_ptr.vmem [resolvable:$true] %s232
          %238 = dma.hbm_to_vmem [thread:$0]  %s4, 4096, %s233, [#allocation8], 64, 64, 4
        $region28: #{simple_rebuild_fc_forward.1} parent=11 // pred_fallthru
          _
        // Predicated region
        $region29: #{simple_rebuild_fc_forward.1} parent=11 // pred_check
          %p239 = pneg %p148
        $region30: #{simple_rebuild_fc_forward.1} parent=11 // pred_check_branch
          %241 = sbr.rel (%p239) target = $region32
        $region31: #{simple_rebuild_fc_forward.1} parent=11 // pred_region
          _
        $region32: #{simple_rebuild_fc_forward.1} parent=11 // pred_fallthru
          _
      $region12: #{simple_rebuild_fc_forward.1} parent=5 // pred_fallthru
        _
      %p242 = scmp.lt.s32.totalorder %s17, 2
      // Predicated region
      $region33: #{simple_rebuild_fc_forward.1} parent=5 // pred_check
        %p243 = pneg %p242
      $region34: #{simple_rebuild_fc_forward.1} parent=5 // pred_check_branch
        %245 = sbr.rel (%p243) target = $region36
      $region35: #{simple_rebuild_fc_forward.1} parent=5 // pred_region
        // Predicated region
        $region37: #{simple_rebuild_fc_forward.1} parent=35 // pred_check
          %p246 = pneg %p37
        $region38: #{simple_rebuild_fc_forward.1} parent=35 // pred_check_branch
          %248 = sbr.rel (%p246) target = $region40
        $region39: #{simple_rebuild_fc_forward.1} parent=35 // pred_region
          %s249 = sand.u32 %s27, 1
          %s250 = scalar_lea.sflag [#allocation3], %s249
          %s251 = sand.u32 %s27, 1
          %s252 = smul.addr %s251, 16
          %s253 = scalar_lea.vmem [#allocation2], %s252
          %s255 = ssub.s32 256, 256
          %256 = vsyncadd %s250, %s255
          %s257 = smul.addr %s17, 2
          %s258 = smul.addr %s257, 128
          %s259 = scalar_lea.hbm %s0, %s258
          %s260 = sshll.u32 %s253, 4
          %s261 = int_to_ptr.vmem [resolvable:$true] %s260
          %266 = dma.hbm_to_vmem [thread:$0]  %s259, 256, %s261, %s250, 128, 128, 8
        $region40: #{simple_rebuild_fc_forward.1} parent=35 // pred_fallthru
          _
      $region36: #{simple_rebuild_fc_forward.1} parent=5 // pred_fallthru
        _
      %p267 = scmp.le.s32.totalorder 1, %s17
      %p268 = scmp.lt.s32.totalorder %s17, 3
      %p269 = pnand %p267, %p268
      %p270 = pneg %p269
      // Predicated region
      $region41: #{simple_rebuild_fc_forward.1} parent=5 // pred_check
        _
      $region42: #{simple_rebuild_fc_forward.1} parent=5 // pred_check_branch
        %272 = sbr.rel (%p269) target = $region44
      $region43: #{simple_rebuild_fc_forward.1} parent=5 // pred_region
        %s273 = ssub.s32 %s17, 1
        %s274 = sand.u32 %s30, 1
        %s275 = scalar_lea.sflag [#allocation3], %s274
        %s276 = sand.u32 %s30, 1
        %s277 = smul.addr %s276, 16
        %s278 = scalar_lea.vmem [#allocation2], %s277
        // Predicated region
        $region45: #{simple_rebuild_fc_forward.1} parent=43 // pred_check
          %p279 = pneg %p43
        $region46: #{simple_rebuild_fc_forward.1} parent=43 // pred_check_branch
          %281 = sbr.rel (%p279) target = $region48
        $region47: #{simple_rebuild_fc_forward.1} parent=43 // pred_region
          %282 = dma.done %s275, 256
        $region48: #{simple_rebuild_fc_forward.1} parent=43 // pred_fallthru
          _
        // Predicated region
        $region49: #{simple_rebuild_fc_forward.1} parent=43 // pred_check
          %p283 = pneg %p64
        $region50: #{simple_rebuild_fc_forward.1} parent=43 // pred_check_branch
          %285 = sbr.rel (%p283) target = $region52
        $region51: #{simple_rebuild_fc_forward.1} parent=43 // pred_region
          %286 = dma.done [#allocation5], 1536
        $region52: #{simple_rebuild_fc_forward.1} parent=43 // pred_fallthru
          _
        // Predicated region
        $region53: #{simple_rebuild_fc_forward.1} parent=43 // pred_check
          %p287 = pneg %p85
        $region54: #{simple_rebuild_fc_forward.1} parent=43 // pred_check_branch
          %289 = sbr.rel (%p287) target = $region56
        $region55: #{simple_rebuild_fc_forward.1} parent=43 // pred_region
          %290 = dma.done [#allocation5], 1536
        $region56: #{simple_rebuild_fc_forward.1} parent=43 // pred_fallthru
          _
        // Predicated region
        $region57: #{simple_rebuild_fc_forward.1} parent=43 // pred_check
          %p291 = pneg %p106
        $region58: #{simple_rebuild_fc_forward.1} parent=43 // pred_check_branch
          %293 = sbr.rel (%p291) target = $region60
        $region59: #{simple_rebuild_fc_forward.1} parent=43 // pred_region
          %294 = dma.done [#allocation8], 64
        $region60: #{simple_rebuild_fc_forward.1} parent=43 // pred_fallthru
          _
        // Predicated region
        $region61: #{simple_rebuild_fc_forward.1} parent=43 // pred_check
          %p295 = pneg %p127
        $region62: #{simple_rebuild_fc_forward.1} parent=43 // pred_check_branch
          %297 = sbr.rel (%p295) target = $region64
        $region63: #{simple_rebuild_fc_forward.1} parent=43 // pred_region
          %298 = dma.done [#allocation8], 4096
        $region64: #{simple_rebuild_fc_forward.1} parent=43 // pred_fallthru
          _
        %s299 = sand.u32 %s30, 1
        %s300 = scalar_lea.sflag [#allocation3], %s299
        %s301 = sand.u32 %s30, 1
        %s302 = smul.addr %s301, 16
        %s303 = scalar_lea.vmem [#allocation2], %s302
        %p304 = pneg %p43
        %p305 = pneg %p40
        %p306 = pneg %p64
        %p307 = pneg %p61
        %p308 = pneg %p85
        %p309 = pneg %p82
        %p310 = pneg %p106
        %p311 = pneg %p103
        %p312 = pneg %p127
        %p313 = pneg %p124
        %p314 = pneg %p148
        %p315 = pneg %p145
        %p316 = pneg %p174
        %p317 = pneg %p171
        %p318 = scmp.lt.s32.totalorder %s22, 1
        %s319 = scalar_select %p318, %s22, 1
        %s320 = smul.addr %s319, 2
        %s321 = smul.addr %s320, 8
        %s322 = scalar_lea.vmem %s6, %s321
        %p323 = scmp.lt.s32.totalorder %s22, 1
        %s324 = scalar_select %p323, %s22, 1
        %s325 = smul.addr %s324, 2
        %s326 = smul.addr %s325, 8
        %s327 = scalar_lea.vmem %s6, %s326
        %v329 = vld [vmem:[%s278] sm:$0xff]
        %v330 = vld [vmem:[%s278 + $0x8] sm:$0xff]
        %vm331 = vcmask 392192
        %v332 = vsel %vm331, %v329, -inf
        %v333 = vsel %vm331, %v330, -inf
        %v334 = vmax.f32 %v332, %v333
        %v335 = vrot.slane %v334, 4
        %v336 = vmax.f32 %v334, %v335
        %v337 = vrot.slane %v336, 2
        %v338 = vmax.f32 %v336, %v337
        %v339 = vrot.slane %v338, 1
        %v340 = vmax.f32 %v338, %v339
        %v341 = vpack.c.bf16 %v340, %v340
        %v342 = vld [vmem:[#allocation6] sm:$0xff]
        %v343 = vld [vmem:[#allocation6 + $0x8] sm:$0xff]
        %v344 = vld [vmem:[#allocation6 + $0x10] sm:$0xff]
        %v345 = vld [vmem:[#allocation6 + $0x18] sm:$0xff]
        %v346 = vld [vmem:[#allocation6 + $0x20] sm:$0xff]
        %v347 = vld [vmem:[#allocation6 + $0x28] sm:$0xff]
        %v348 = vld [vmem:[#allocation6 + $0x30] sm:$0xff]
        %v349 = vld [vmem:[#allocation6 + $0x38] sm:$0xff]
        %v350 = vld [vmem:[#allocation6 + $0x40] sm:$0xff]
        %v351 = vld [vmem:[#allocation6 + $0x48] sm:$0xff]
        %v352 = vld [vmem:[#allocation6 + $0x50] sm:$0xff]
        %v353 = vld [vmem:[#allocation6 + $0x58] sm:$0xff]
        %v354 = vld [vmem:[#allocation7] sm:$0xf]
        %v367 = vunpack.c.l.b16 %v342
        %v368 = vunpack.c.h.b16 %v342
        %v369 = vunpack.c.l.b16 %v343
        %v370 = vunpack.c.h.b16 %v343
        %v371 = vunpack.c.l.b16 %v344
        %v372 = vunpack.c.h.b16 %v344
        %v373 = vunpack.c.l.b16 %v345
        %v374 = vunpack.c.h.b16 %v345
        %v375 = vunpack.c.l.b16 %v346
        %v376 = vunpack.c.h.b16 %v346
        %v377 = vunpack.c.l.b16 %v347
        %v378 = vunpack.c.h.b16 %v347
        %v379 = vunpack.c.l.b16 %v348
        %v380 = vunpack.c.h.b16 %v348
        %v381 = vunpack.c.l.b16 %v349
        %v382 = vunpack.c.h.b16 %v349
        %v383 = vunpack.c.l.b16 %v350
        %v384 = vunpack.c.h.b16 %v350
        %v385 = vunpack.c.l.b16 %v351
        %v386 = vunpack.c.h.b16 %v351
        %v387 = vunpack.c.l.b16 %v352
        %v388 = vunpack.c.h.b16 %v352
        %v389 = vunpack.c.l.b16 %v353
        %v390 = vunpack.c.h.b16 %v353
        %v391 = vpack.c.b16 %v371, %v367
        %v392 = vpack.c.b16 %v372, %v368
        %v393 = vpack.c.b16 %v373, %v369
        %v394 = vpack.c.b16 %v374, %v370
        %v395 = vpack.c.b16 %v379, %v375
        %v396 = vpack.c.b16 %v380, %v376
        %v397 = vpack.c.b16 %v381, %v377
        %v398 = vpack.c.b16 %v382, %v378
        %v399 = vpack.c.b16 %v387, %v383
        %v400 = vpack.c.b16 %v388, %v384
        %v401 = vpack.c.b16 %v389, %v385
        %v402 = vpack.c.b16 %v390, %v386
        %v416 = vlaneseq
        %v417 = vshrl.u32 %v416, 7
        %v418 = vsub.s32 0, %v417
        %v419 = vrot.slane %v354, %v418
        %v420 = vlaneseq
        %v421 = vshrl.u32 %v420, 7
        %v422 = vsub.s32 1, %v421
        %v423 = vrot.slane %v354, %v422
        %v424 = vlaneseq
        %v425 = vshrl.u32 %v424, 7
        %v426 = vsub.s32 2, %v425
        %v427 = vrot.slane %v354, %v426
        %v428 = vlaneseq
        %v429 = vshrl.u32 %v428, 7
        %v430 = vsub.s32 3, %v429
        %v431 = vrot.slane %v354, %v430
        %v437 = vsel %vm331, %v341, 0
        %439 = vmatprep.subr.bf16.mxu0 %v392
        %440 = vmatpush1.bf16.msra.mxu0 %v391
        %441 = vmatprep.subr.bf16.mxu0 %v396
        %442 = vmatpush1.bf16.msra.mxu0 %v395
        %443 = vmatprep.subr.bf16.mxu0 %v400
        %444 = vmatpush1.bf16.msra.mxu0 %v399
        %445 = vmatprep.subr.bf16.mxu0 0
        %446 = vmatpush1.bf16.msra.mxu0 0
        %447 = vmatprep.subr.bf16.mxu0 0
        %448 = vmatpush1.bf16.msra.mxu0 0
        %449 = vmatprep.subr.bf16.mxu0 0
        %450 = vmatpush1.bf16.msra.mxu0 0
        %451 = vmatprep.subr.bf16.mxu0 0
        %452 = vmatpush1.bf16.msra.mxu0 0
        %453 = vmatprep.subr.bf16.mxu0 0
        %454 = vmatpush1.bf16.msra.mxu0 0
        %455 = vmatprep.subr.bf16.mxu0 0
        %456 = vmatpush1.bf16.msra.mxu0 0
        %457 = vmatprep.subr.bf16.mxu0 0
        %458 = vmatpush1.bf16.msra.mxu0 0
        %459 = vmatprep.subr.bf16.mxu0 0
        %460 = vmatpush1.bf16.msra.mxu0 0
        %461 = vmatprep.subr.bf16.mxu0 0
        %462 = vmatpush1.bf16.msra.mxu0 0
        %463 = vmatprep.subr.bf16.mxu0 0
        %464 = vmatpush1.bf16.msra.mxu0 0
        %465 = vmatprep.subr.bf16.mxu0 0
        %466 = vmatpush1.bf16.msra.mxu0 0
        %467 = vmatprep.subr.bf16.mxu0 0
        %468 = vmatpush1.bf16.msra.mxu0 0
        %469 = vmatprep.subr.bf16.mxu0 0
        %470 = vmatpush1.bf16.msra.mxu0 0
        %471 = vmatprep.mubr.bf16.mxu0 0
        %472 = vmatmul.mubr.bf16.gmra.mrb[0].mxu0 %v437
        %v473 = vpop.f32.mrb[0].mxu0
        %v474 = vadd.f32 %v419, %v473
        %v475 = vpop.f32.mrb[0].mxu0
        %v476 = vadd.f32 %v423, %v475
        %v477 = vpop.f32.mrb[0].mxu0
        %v478 = vpop.f32.mrb[0].mxu0
        %479 = vdwg.mxu0
        %480 = vmatprep.subr.bf16.mxu0 %v394
        %481 = vmatpush1.bf16.msra.mxu0 %v393
        %482 = vmatprep.subr.bf16.mxu0 %v398
        %483 = vmatpush1.bf16.msra.mxu0 %v397
        %484 = vmatprep.subr.bf16.mxu0 %v402
        %485 = vmatpush1.bf16.msra.mxu0 %v401
        %486 = vmatprep.subr.bf16.mxu0 0
        %487 = vmatpush1.bf16.msra.mxu0 0
        %488 = vmatprep.subr.bf16.mxu0 0
        %489 = vmatpush1.bf16.msra.mxu0 0
        %490 = vmatprep.subr.bf16.mxu0 0
        %491 = vmatpush1.bf16.msra.mxu0 0
        %492 = vmatprep.subr.bf16.mxu0 0
        %493 = vmatpush1.bf16.msra.mxu0 0
        %494 = vmatprep.subr.bf16.mxu0 0
        %495 = vmatpush1.bf16.msra.mxu0 0
        %496 = vmatprep.subr.bf16.mxu0 0
        %497 = vmatpush1.bf16.msra.mxu0 0
        %498 = vmatprep.subr.bf16.mxu0 0
        %499 = vmatpush1.bf16.msra.mxu0 0
        %500 = vmatprep.subr.bf16.mxu0 0
        %501 = vmatpush1.bf16.msra.mxu0 0
        %502 = vmatprep.subr.bf16.mxu0 0
        %503 = vmatpush1.bf16.msra.mxu0 0
        %504 = vmatprep.subr.bf16.mxu0 0
        %505 = vmatpush1.bf16.msra.mxu0 0
        %506 = vmatprep.subr.bf16.mxu0 0
        %507 = vmatpush1.bf16.msra.mxu0 0
        %508 = vmatprep.subr.bf16.mxu0 0
        %509 = vmatpush1.bf16.msra.mxu0 0
        %510 = vmatprep.subr.bf16.mxu0 0
        %511 = vmatpush1.bf16.msra.mxu0 0
        %512 = vmatprep.mubr.bf16.mxu0 0
        %513 = vmatmul.mubr.bf16.gmra.mrb[0].mxu0 %v437
        %v514 = vpop.f32.mrb[0].mxu0
        %v515 = vadd.f32 %v427, %v514
        %v516 = vpop.f32.mrb[0].mxu0
        %v517 = vadd.f32 %v431, %v516
        %v518 = vpop.f32.mrb[0].mxu0
        %v519 = vpop.f32.mrb[0].mxu0
        %520 = vdwg.mxu0
        %v521 = vpack.c.bf16 %v330, %v329
        %v522 = vld [vmem:[#allocation4] sm:$0xff]
        %v523 = vld [vmem:[#allocation4 + $0x10] sm:$0xff]
        %v524 = vld [vmem:[#allocation4 + $0x20] sm:$0xff]
        %v525 = vld [vmem:[#allocation4 + $0x30] sm:$0xff]
        %v526 = vld [vmem:[#allocation4 + $0x40] sm:$0xff]
        %v527 = vld [vmem:[#allocation4 + $0x50] sm:$0xff]
        %v528 = vlaneseq
        %v529 = vshrl.u32 %v528, 7
        %v530 = vsub.s32 0, %v529
        %v531 = vrot.slane %v474, %v530
        %v532 = vlaneseq
        %v533 = vshrl.u32 %v532, 7
        %v534 = vsub.s32 0, %v533
        %v535 = vrot.slane %v476, %v534
        %v542 = vunpack.c.l.b16 %v522
        %v543 = vunpack.c.h.b16 %v522
        %v544 = vunpack.c.l.b16 %v523
        %v545 = vunpack.c.h.b16 %v523
        %v546 = vunpack.c.l.b16 %v524
        %v547 = vunpack.c.h.b16 %v524
        %v548 = vunpack.c.l.b16 %v525
        %v549 = vunpack.c.h.b16 %v525
        %v550 = vunpack.c.l.b16 %v526
        %v551 = vunpack.c.h.b16 %v526
        %v552 = vunpack.c.l.b16 %v527
        %v553 = vunpack.c.h.b16 %v527
        %v554 = vpack.c.b16 %v544, %v542
        %v555 = vpack.c.b16 %v545, %v543
        %v556 = vpack.c.b16 %v548, %v546
        %v557 = vpack.c.b16 %v549, %v547
        %v558 = vpack.c.b16 %v552, %v550
        %v559 = vpack.c.b16 %v553, %v551
        %v567 = vsel %vm331, %v521, 0
        %569 = vmatprep.subr.bf16.mxu0 %v555
        %570 = vmatpush1.bf16.msra.mxu0 %v554
        %571 = vmatprep.subr.bf16.mxu0 %v557
        %572 = vmatpush1.bf16.msra.mxu0 %v556
        %573 = vmatprep.subr.bf16.mxu0 %v559
        %574 = vmatpush1.bf16.msra.mxu0 %v558
        %575 = vmatprep.subr.bf16.mxu0 0
        %576 = vmatpush1.bf16.msra.mxu0 0
        %577 = vmatprep.subr.bf16.mxu0 0
        %578 = vmatpush1.bf16.msra.mxu0 0
        %579 = vmatprep.subr.bf16.mxu0 0
        %580 = vmatpush1.bf16.msra.mxu0 0
        %581 = vmatprep.subr.bf16.mxu0 0
        %582 = vmatpush1.bf16.msra.mxu0 0
        %583 = vmatprep.subr.bf16.mxu0 0
        %584 = vmatpush1.bf16.msra.mxu0 0
        %585 = vmatprep.subr.bf16.mxu0 0
        %586 = vmatpush1.bf16.msra.mxu0 0
        %587 = vmatprep.subr.bf16.mxu0 0
        %588 = vmatpush1.bf16.msra.mxu0 0
        %589 = vmatprep.subr.bf16.mxu0 0
        %590 = vmatpush1.bf16.msra.mxu0 0
        %591 = vmatprep.subr.bf16.mxu0 0
        %592 = vmatpush1.bf16.msra.mxu0 0
        %593 = vmatprep.subr.bf16.mxu0 0
        %594 = vmatpush1.bf16.msra.mxu0 0
        %595 = vmatprep.subr.bf16.mxu0 0
        %596 = vmatpush1.bf16.msra.mxu0 0
        %597 = vmatprep.subr.bf16.mxu0 0
        %598 = vmatpush1.bf16.msra.mxu0 0
        %599 = vmatprep.subr.bf16.mxu0 0
        %600 = vmatpush1.bf16.msra.mxu0 0
        %601 = vmatprep.mubr.bf16.mxu0 0
        %602 = vmatmul.mubr.bf16.gmra.mrb[0].mxu0 %v567
        %v603 = vpop.f32.mrb[0].mxu0
        %v604 = vadd.f32 %v531, %v603
        %v605 = vpop.f32.mrb[0].mxu0
        %v606 = vadd.f32 %v535, %v605
        %v607 = vpop.f32.mrb[0].mxu0
        %v608 = vadd.f32 %v531, %v607
        %v609 = vpop.f32.mrb[0].mxu0
        %v610 = vadd.f32 %v535, %v609
        %611 = vdwg.mxu0
        %v612 = vmul.f32 %v604, 0.5
        %v613 = vmul.f32 %v606, 0.5
        %v614 = vmul.f32 %v608, 0.5
        %v615 = vmul.f32 %v610, 0.5
        %v616 = vmul.f32 %v604, 0.70710677
        %v617 = vmul.f32 %v606, 0.70710677
        %v618 = vmul.f32 %v608, 0.70710677
        %v619 = vmul.f32 %v610, 0.70710677
        %vm620 = vcmp.ge.f32.partialorder %v616, 0.0
        %vm621 = vcmp.ge.f32.partialorder %v617, 0.0
        %vm622 = vcmp.ge.f32.partialorder %v618, 0.0
        %vm623 = vcmp.ge.f32.partialorder %v619, 0.0
        %v624 = vsel %vm620, 1.0, -1.0
        %v625 = vsel %vm621, 1.0, -1.0
        %v626 = vsel %vm622, 1.0, -1.0
        %v627 = vsel %vm623, 1.0, -1.0
        %v628 = vand.u32 2147483647, %v616
        %v629 = vand.u32 2147483647, %v617
        %v630 = vand.u32 2147483647, %v618
        %v631 = vand.u32 2147483647, %v619
        %v632 = vmul.f32 %v628, 0.3275911
        %v633 = vmul.f32 %v629, 0.3275911
        %v634 = vmul.f32 %v630, 0.3275911
        %v635 = vmul.f32 %v631, 0.3275911
        %v636 = vadd.f32 %v632, 1.0
        %v637 = vadd.f32 %v633, 1.0
        %v638 = vadd.f32 %v634, 1.0
        %v639 = vadd.f32 %v635, 1.0
        %v640 = vrcp.pop %v636
        %v641 = vrcp.pop %v637
        %v642 = vrcp.pop %v638
        %v643 = vrcp.pop %v639
        %v644 = vmul.f32 %v640, 1.0614054
        %v645 = vmul.f32 %v641, 1.0614054
        %v646 = vmul.f32 %v642, 1.0614054
        %v647 = vmul.f32 %v643, 1.0614054
        %v648 = vadd.f32 %v644, -1.4531521
        %v649 = vadd.f32 %v645, -1.4531521
        %v650 = vadd.f32 %v646, -1.4531521
        %v651 = vadd.f32 %v647, -1.4531521
        %v652 = vmul.f32 %v648, %v640
        %v653 = vmul.f32 %v649, %v641
        %v654 = vmul.f32 %v650, %v642
        %v655 = vmul.f32 %v651, %v643
        %v656 = vadd.f32 %v652, 1.4214138
        %v657 = vadd.f32 %v653, 1.4214138
        %v658 = vadd.f32 %v654, 1.4214138
        %v659 = vadd.f32 %v655, 1.4214138
        %v660 = vmul.f32 %v656, %v640
        %v661 = vmul.f32 %v657, %v641
        %v662 = vmul.f32 %v658, %v642
        %v663 = vmul.f32 %v659, %v643
        %v664 = vadd.f32 %v660, -0.28449672
        %v665 = vadd.f32 %v661, -0.28449672
        %v666 = vadd.f32 %v662, -0.28449672
        %v667 = vadd.f32 %v663, -0.28449672
        %v668 = vmul.f32 %v664, %v640
        %v669 = vmul.f32 %v665, %v641
        %v670 = vmul.f32 %v666, %v642
        %v671 = vmul.f32 %v667, %v643
        %v672 = vadd.f32 %v668, 0.2548296
        %v673 = vadd.f32 %v669, 0.2548296
        %v674 = vadd.f32 %v670, 0.2548296
        %v675 = vadd.f32 %v671, 0.2548296
        %v676 = vmul.f32 %v672, %v640
        %v677 = vmul.f32 %v673, %v641
        %v678 = vmul.f32 %v674, %v642
        %v679 = vmul.f32 %v675, %v643
        %v680 = vsub.f32 0.0, %v628
        %v681 = vsub.f32 0.0, %v629
        %v682 = vsub.f32 0.0, %v630
        %v683 = vsub.f32 0.0, %v631
        %v684 = vmul.f32 %v680, %v628
        %v685 = vmul.f32 %v681, %v629
        %v686 = vmul.f32 %v682, %v630
        %v687 = vmul.f32 %v683, %v631
        %v688 = vmul.f32 %v684, 1.442695
        %v689 = vpow.pop %v688
        %v690 = vmul.f32 %v685, 1.442695
        %v691 = vpow.pop %v690
        %v692 = vmul.f32 %v686, 1.442695
        %v693 = vpow.pop %v692
        %v694 = vmul.f32 %v687, 1.442695
        %v695 = vpow.pop %v694
        %v696 = vmul.f32 %v676, %v689
        %v697 = vmul.f32 %v677, %v691
        %v698 = vmul.f32 %v678, %v693
        %v699 = vmul.f32 %v679, %v695
        %v700 = vsub.f32 1.0, %v696
        %v701 = vsub.f32 1.0, %v697
        %v702 = vsub.f32 1.0, %v698
        %v703 = vsub.f32 1.0, %v699
        %v704 = vmul.f32 %v624, %v700
        %v705 = vmul.f32 %v625, %v701
        %v706 = vmul.f32 %v626, %v702
        %v707 = vmul.f32 %v627, %v703
        %v708 = vadd.f32 %v704, 1.0
        %v709 = vadd.f32 %v705, 1.0
        %v710 = vadd.f32 %v706, 1.0
        %v711 = vadd.f32 %v707, 1.0
        %v712 = vmul.f32 %v612, %v708
        %v713 = vmul.f32 %v613, %v709
        %v714 = vmul.f32 %v614, %v710
        %v715 = vmul.f32 %v615, %v711
        %v716 = vpack.c.bf16 %v714, %v712
        %v717 = vpack.c.bf16 %v715, %v713
        %v718 = vld [vmem:[#allocation9] sm:$0xf]
        %v719 = vld [vmem:[#allocation9 + $0x4] sm:$0xf]
        %v720 = vld [vmem:[#allocation9 + $0x8] sm:$0xf]
        %v721 = vld [vmem:[#allocation9 + $0xc] sm:$0xf]
        %v722 = vld [vmem:[#allocation9 + $0x10] sm:$0xf]
        %v723 = vld [vmem:[#allocation9 + $0x14] sm:$0xf]
        %v724 = vld [vmem:[#allocation9 + $0x18] sm:$0xf]
        %v725 = vld [vmem:[#allocation9 + $0x1c] sm:$0xf]
        %v726 = vld [vmem:[#allocation9 + $0x20] sm:$0xf]
        %v727 = vld [vmem:[#allocation9 + $0x24] sm:$0xf]
        %v728 = vld [vmem:[#allocation9 + $0x28] sm:$0xf]
        %v729 = vld [vmem:[#allocation9 + $0x2c] sm:$0xf]
        %v730 = vld [vmem:[#allocation9 + $0x30] sm:$0xf]
        %v731 = vld [vmem:[#allocation9 + $0x34] sm:$0xf]
        %v732 = vld [vmem:[#allocation9 + $0x38] sm:$0xf]
        %v733 = vld [vmem:[#allocation9 + $0x3c] sm:$0xf]
        %v734 = vld [vmem:[#allocation9 + $0x40] sm:$0xf]
        %v735 = vld [vmem:[#allocation9 + $0x44] sm:$0xf]
        %v736 = vld [vmem:[#allocation9 + $0x48] sm:$0xf]
        %v737 = vld [vmem:[#allocation9 + $0x4c] sm:$0xf]
        %v738 = vld [vmem:[#allocation9 + $0x50] sm:$0xf]
        %v739 = vld [vmem:[#allocation9 + $0x54] sm:$0xf]
        %v740 = vld [vmem:[#allocation9 + $0x58] sm:$0xf]
        %v741 = vld [vmem:[#allocation9 + $0x5c] sm:$0xf]
        %v742 = vld [vmem:[#allocation9 + $0x60] sm:$0xf]
        %v743 = vld [vmem:[#allocation9 + $0x64] sm:$0xf]
        %v744 = vld [vmem:[#allocation9 + $0x68] sm:$0xf]
        %v745 = vld [vmem:[#allocation9 + $0x6c] sm:$0xf]
        %v746 = vld [vmem:[#allocation9 + $0x70] sm:$0xf]
        %v747 = vld [vmem:[#allocation9 + $0x74] sm:$0xf]
        %v748 = vld [vmem:[#allocation9 + $0x78] sm:$0xf]
        %v749 = vld [vmem:[#allocation9 + $0x7c] sm:$0xf]
        %v750 = vld [vmem:[#allocation4 + $0x8] sm:$0xff]
        %v751 = vld [vmem:[#allocation4 + $0x18] sm:$0xff]
        %v752 = vld [vmem:[#allocation4 + $0x28] sm:$0xff]
        %v753 = vld [vmem:[#allocation4 + $0x38] sm:$0xff]
        %v754 = vld [vmem:[#allocation4 + $0x48] sm:$0xff]
        %v755 = vld [vmem:[#allocation4 + $0x58] sm:$0xff]
        %v756 = vlaneseq
        %v757 = vshrl.u32 %v756, 7
        %v758 = vsub.s32 0, %v757
        %v759 = vrot.slane %v515, %v758
        %v760 = vlaneseq
        %v761 = vshrl.u32 %v760, 7
        %v762 = vsub.s32 0, %v761
        %v763 = vrot.slane %v517, %v762
        %v770 = vunpack.c.l.b16 %v750
        %v771 = vunpack.c.h.b16 %v750
        %v772 = vunpack.c.l.b16 %v751
        %v773 = vunpack.c.h.b16 %v751
        %v774 = vunpack.c.l.b16 %v752
        %v775 = vunpack.c.h.b16 %v752
        %v776 = vunpack.c.l.b16 %v753
        %v777 = vunpack.c.h.b16 %v753
        %v778 = vunpack.c.l.b16 %v754
        %v779 = vunpack.c.h.b16 %v754
        %v780 = vunpack.c.l.b16 %v755
        %v781 = vunpack.c.h.b16 %v755
        %v782 = vpack.c.b16 %v772, %v770
        %v783 = vpack.c.b16 %v773, %v771
        %v784 = vpack.c.b16 %v776, %v774
        %v785 = vpack.c.b16 %v777, %v775
        %v786 = vpack.c.b16 %v780, %v778
        %v787 = vpack.c.b16 %v781, %v779
        %794 = vmatprep.subr.bf16.mxu0 %v783
        %795 = vmatpush1.bf16.msra.mxu0 %v782
        %796 = vmatprep.subr.bf16.mxu0 %v785
        %797 = vmatpush1.bf16.msra.mxu0 %v784
        %798 = vmatprep.subr.bf16.mxu0 %v787
        %799 = vmatpush1.bf16.msra.mxu0 %v786
        %800 = vmatprep.subr.bf16.mxu0 0
        %801 = vmatpush1.bf16.msra.mxu0 0
        %802 = vmatprep.subr.bf16.mxu0 0
        %803 = vmatpush1.bf16.msra.mxu0 0
        %804 = vmatprep.subr.bf16.mxu0 0
        %805 = vmatpush1.bf16.msra.mxu0 0
        %806 = vmatprep.subr.bf16.mxu0 0
        %807 = vmatpush1.bf16.msra.mxu0 0
        %808 = vmatprep.subr.bf16.mxu0 0
        %809 = vmatpush1.bf16.msra.mxu0 0
        %810 = vmatprep.subr.bf16.mxu0 0
        %811 = vmatpush1.bf16.msra.mxu0 0
        %812 = vmatprep.subr.bf16.mxu0 0
        %813 = vmatpush1.bf16.msra.mxu0 0
        %814 = vmatprep.subr.bf16.mxu0 0
        %815 = vmatpush1.bf16.msra.mxu0 0
        %816 = vmatprep.subr.bf16.mxu0 0
        %817 = vmatpush1.bf16.msra.mxu0 0
        %818 = vmatprep.subr.bf16.mxu0 0
        %819 = vmatpush1.bf16.msra.mxu0 0
        %820 = vmatprep.subr.bf16.mxu0 0
        %821 = vmatpush1.bf16.msra.mxu0 0
        %822 = vmatprep.subr.bf16.mxu0 0
        %823 = vmatpush1.bf16.msra.mxu0 0
        %824 = vmatprep.subr.bf16.mxu0 0
        %825 = vmatpush1.bf16.msra.mxu0 0
        %826 = vmatprep.mubr.bf16.mxu0 0
        %827 = vmatmul.mubr.bf16.gmra.mrb[0].mxu0 %v567
        %v828 = vpop.f32.mrb[0].mxu0
        %v829 = vadd.f32 %v759, %v828
        %v830 = vpop.f32.mrb[0].mxu0
        %v831 = vadd.f32 %v763, %v830
        %v832 = vpop.f32.mrb[0].mxu0
        %v833 = vadd.f32 %v759, %v832
        %v834 = vpop.f32.mrb[0].mxu0
        %v835 = vadd.f32 %v763, %v834
        %836 = vdwg.mxu0
        %v837 = vmul.f32 %v829, 0.5
        %v838 = vmul.f32 %v831, 0.5
        %v839 = vmul.f32 %v833, 0.5
        %v840 = vmul.f32 %v835, 0.5
        %v841 = vmul.f32 %v829, 0.70710677
        %v842 = vmul.f32 %v831, 0.70710677
        %v843 = vmul.f32 %v833, 0.70710677
        %v844 = vmul.f32 %v835, 0.70710677
        %vm845 = vcmp.ge.f32.partialorder %v841, 0.0
        %vm846 = vcmp.ge.f32.partialorder %v842, 0.0
        %vm847 = vcmp.ge.f32.partialorder %v843, 0.0
        %vm848 = vcmp.ge.f32.partialorder %v844, 0.0
        %v849 = vsel %vm845, 1.0, -1.0
        %v850 = vsel %vm846, 1.0, -1.0
        %v851 = vsel %vm847, 1.0, -1.0
        %v852 = vsel %vm848, 1.0, -1.0
        %v853 = vand.u32 2147483647, %v841
        %v854 = vand.u32 2147483647, %v842
        %v855 = vand.u32 2147483647, %v843
        %v856 = vand.u32 2147483647, %v844
        %v857 = vmul.f32 %v853, 0.3275911
        %v858 = vmul.f32 %v854, 0.3275911
        %v859 = vmul.f32 %v855, 0.3275911
        %v860 = vmul.f32 %v856, 0.3275911
        %v861 = vadd.f32 %v857, 1.0
        %v862 = vadd.f32 %v858, 1.0
        %v863 = vadd.f32 %v859, 1.0
        %v864 = vadd.f32 %v860, 1.0
        %v865 = vrcp.pop %v861
        %v866 = vrcp.pop %v862
        %v867 = vrcp.pop %v863
        %v868 = vrcp.pop %v864
        %v869 = vmul.f32 %v865, 1.0614054
        %v870 = vmul.f32 %v866, 1.0614054
        %v871 = vmul.f32 %v867, 1.0614054
        %v872 = vmul.f32 %v868, 1.0614054
        %v873 = vadd.f32 %v869, -1.4531521
        %v874 = vadd.f32 %v870, -1.4531521
        %v875 = vadd.f32 %v871, -1.4531521
        %v876 = vadd.f32 %v872, -1.4531521
        %v877 = vmul.f32 %v873, %v865
        %v878 = vmul.f32 %v874, %v866
        %v879 = vmul.f32 %v875, %v867
        %v880 = vmul.f32 %v876, %v868
        %v881 = vadd.f32 %v877, 1.4214138
        %v882 = vadd.f32 %v878, 1.4214138
        %v883 = vadd.f32 %v879, 1.4214138
        %v884 = vadd.f32 %v880, 1.4214138
        %v885 = vmul.f32 %v881, %v865
        %v886 = vmul.f32 %v882, %v866
        %v887 = vmul.f32 %v883, %v867
        %v888 = vmul.f32 %v884, %v868
        %v889 = vadd.f32 %v885, -0.28449672
        %v890 = vadd.f32 %v886, -0.28449672
        %v891 = vadd.f32 %v887, -0.28449672
        %v892 = vadd.f32 %v888, -0.28449672
        %v893 = vmul.f32 %v889, %v865
        %v894 = vmul.f32 %v890, %v866
        %v895 = vmul.f32 %v891, %v867
        %v896 = vmul.f32 %v892, %v868
        %v897 = vadd.f32 %v893, 0.2548296
        %v898 = vadd.f32 %v894, 0.2548296
        %v899 = vadd.f32 %v895, 0.2548296
        %v900 = vadd.f32 %v896, 0.2548296
        %v901 = vmul.f32 %v897, %v865
        %v902 = vmul.f32 %v898, %v866
        %v903 = vmul.f32 %v899, %v867
        %v904 = vmul.f32 %v900, %v868
        %v905 = vsub.f32 0.0, %v853
        %v906 = vsub.f32 0.0, %v854
        %v907 = vsub.f32 0.0, %v855
        %v908 = vsub.f32 0.0, %v856
        %v909 = vmul.f32 %v905, %v853
        %v910 = vmul.f32 %v906, %v854
        %v911 = vmul.f32 %v907, %v855
        %v912 = vmul.f32 %v908, %v856
        %v913 = vmul.f32 %v909, 1.442695
        %v914 = vpow.pop %v913
        %v915 = vmul.f32 %v910, 1.442695
        %v916 = vpow.pop %v915
        %v917 = vmul.f32 %v911, 1.442695
        %v918 = vpow.pop %v917
        %v919 = vmul.f32 %v912, 1.442695
        %v920 = vpow.pop %v919
        %v921 = vmul.f32 %v901, %v914
        %v922 = vmul.f32 %v902, %v916
        %v923 = vmul.f32 %v903, %v918
        %v924 = vmul.f32 %v904, %v920
        %v925 = vsub.f32 1.0, %v921
        %v926 = vsub.f32 1.0, %v922
        %v927 = vsub.f32 1.0, %v923
        %v928 = vsub.f32 1.0, %v924
        %v929 = vmul.f32 %v849, %v925
        %v930 = vmul.f32 %v850, %v926
        %v931 = vmul.f32 %v851, %v927
        %v932 = vmul.f32 %v852, %v928
        %v933 = vadd.f32 %v929, 1.0
        %v934 = vadd.f32 %v930, 1.0
        %v935 = vadd.f32 %v931, 1.0
        %v936 = vadd.f32 %v932, 1.0
        %v937 = vmul.f32 %v837, %v933
        %v938 = vmul.f32 %v838, %v934
        %v939 = vmul.f32 %v839, %v935
        %v940 = vmul.f32 %v840, %v936
        %v941 = vpack.c.bf16 %v939, %v937
        %v942 = vpack.c.bf16 %v940, %v938
        %v943 = vld [vmem:[#allocation9 + $0x80] sm:$0xf]
        %v944 = vld [vmem:[#allocation9 + $0x84] sm:$0xf]
        %v945 = vld [vmem:[#allocation9 + $0x88] sm:$0xf]
        %v946 = vld [vmem:[#allocation9 + $0x8c] sm:$0xf]
        %v947 = vld [vmem:[#allocation9 + $0x90] sm:$0xf]
        %v948 = vld [vmem:[#allocation9 + $0x94] sm:$0xf]
        %v949 = vld [vmem:[#allocation9 + $0x98] sm:$0xf]
        %v950 = vld [vmem:[#allocation9 + $0x9c] sm:$0xf]
        %v951 = vld [vmem:[#allocation9 + $0xa0] sm:$0xf]
        %v952 = vld [vmem:[#allocation9 + $0xa4] sm:$0xf]
        %v953 = vld [vmem:[#allocation9 + $0xa8] sm:$0xf]
        %v954 = vld [vmem:[#allocation9 + $0xac] sm:$0xf]
        %v955 = vld [vmem:[#allocation9 + $0xb0] sm:$0xf]
        %v956 = vld [vmem:[#allocation9 + $0xb4] sm:$0xf]
        %v957 = vld [vmem:[#allocation9 + $0xb8] sm:$0xf]
        %v958 = vld [vmem:[#allocation9 + $0xbc] sm:$0xf]
        %v959 = vld [vmem:[#allocation9 + $0xc0] sm:$0xf]
        %v960 = vld [vmem:[#allocation9 + $0xc4] sm:$0xf]
        %v961 = vld [vmem:[#allocation9 + $0xc8] sm:$0xf]
        %v962 = vld [vmem:[#allocation9 + $0xcc] sm:$0xf]
        %v963 = vld [vmem:[#allocation9 + $0xd0] sm:$0xf]
        %v964 = vld [vmem:[#allocation9 + $0xd4] sm:$0xf]
        %v965 = vld [vmem:[#allocation9 + $0xd8] sm:$0xf]
        %v966 = vld [vmem:[#allocation9 + $0xdc] sm:$0xf]
        %v967 = vld [vmem:[#allocation9 + $0xe0] sm:$0xf]
        %v968 = vld [vmem:[#allocation9 + $0xe4] sm:$0xf]
        %v969 = vld [vmem:[#allocation9 + $0xe8] sm:$0xf]
        %v970 = vld [vmem:[#allocation9 + $0xec] sm:$0xf]
        %v971 = vld [vmem:[#allocation9 + $0xf0] sm:$0xf]
        %v972 = vld [vmem:[#allocation9 + $0xf4] sm:$0xf]
        %v973 = vld [vmem:[#allocation9 + $0xf8] sm:$0xf]
        %v974 = vld [vmem:[#allocation9 + $0xfc] sm:$0xf]
        %v1007 = vunpack.c.l.b16 %v943
        %v1008 = vunpack.c.l.b16 %v944
        %v1009 = vunpack.c.l.b16 %v945
        %v1010 = vunpack.c.l.b16 %v946
        %v1011 = vunpack.c.l.b16 %v947
        %v1012 = vunpack.c.l.b16 %v948
        %v1013 = vunpack.c.l.b16 %v949
        %v1014 = vunpack.c.l.b16 %v950
        %v1015 = vunpack.c.l.b16 %v951
        %v1016 = vunpack.c.l.b16 %v952
        %v1017 = vunpack.c.l.b16 %v953
        %v1018 = vunpack.c.l.b16 %v954
        %v1019 = vunpack.c.l.b16 %v955
        %v1020 = vunpack.c.l.b16 %v956
        %v1021 = vunpack.c.l.b16 %v957
        %v1022 = vunpack.c.l.b16 %v958
        %v1023 = vunpack.c.l.b16 %v959
        %v1024 = vunpack.c.l.b16 %v960
        %v1025 = vunpack.c.l.b16 %v961
        %v1026 = vunpack.c.l.b16 %v962
        %v1027 = vunpack.c.l.b16 %v963
        %v1028 = vunpack.c.l.b16 %v964
        %v1029 = vunpack.c.l.b16 %v965
        %v1030 = vunpack.c.l.b16 %v966
        %v1031 = vunpack.c.l.b16 %v967
        %v1032 = vunpack.c.l.b16 %v968
        %v1033 = vunpack.c.l.b16 %v969
        %v1034 = vunpack.c.l.b16 %v970
        %v1035 = vunpack.c.l.b16 %v971
        %v1036 = vunpack.c.l.b16 %v972
        %v1037 = vunpack.c.l.b16 %v973
        %v1038 = vunpack.c.l.b16 %v974
        %v1039 = vpack.c.b16 %v1008, %v1007
        %v1040 = vpack.c.b16 %v1010, %v1009
        %v1041 = vpack.c.b16 %v1012, %v1011
        %v1042 = vpack.c.b16 %v1014, %v1013
        %v1043 = vpack.c.b16 %v1016, %v1015
        %v1044 = vpack.c.b16 %v1018, %v1017
        %v1045 = vpack.c.b16 %v1020, %v1019
        %v1046 = vpack.c.b16 %v1022, %v1021
        %v1047 = vpack.c.b16 %v1024, %v1023
        %v1048 = vpack.c.b16 %v1026, %v1025
        %v1049 = vpack.c.b16 %v1028, %v1027
        %v1050 = vpack.c.b16 %v1030, %v1029
        %v1051 = vpack.c.b16 %v1032, %v1031
        %v1052 = vpack.c.b16 %v1034, %v1033
        %v1053 = vpack.c.b16 %v1036, %v1035
        %v1054 = vpack.c.b16 %v1038, %v1037
        %1071 = vmatprep.subr.bf16.mxu0 0
        %1072 = vmatpush1.bf16.msra.mxu0 %v1039
        %1073 = vmatprep.subr.bf16.mxu0 0
        %1074 = vmatpush1.bf16.msra.mxu0 %v1040
        %1075 = vmatprep.subr.bf16.mxu0 0
        %1076 = vmatpush1.bf16.msra.mxu0 %v1041
        %1077 = vmatprep.subr.bf16.mxu0 0
        %1078 = vmatpush1.bf16.msra.mxu0 %v1042
        %1079 = vmatprep.subr.bf16.mxu0 0
        %1080 = vmatpush1.bf16.msra.mxu0 %v1043
        %1081 = vmatprep.subr.bf16.mxu0 0
        %1082 = vmatpush1.bf16.msra.mxu0 %v1044
        %1083 = vmatprep.subr.bf16.mxu0 0
        %1084 = vmatpush1.bf16.msra.mxu0 %v1045
        %1085 = vmatprep.subr.bf16.mxu0 0
        %1086 = vmatpush1.bf16.msra.mxu0 %v1046
        %1087 = vmatprep.subr.bf16.mxu0 0
        %1088 = vmatpush1.bf16.msra.mxu0 %v1047
        %1089 = vmatprep.subr.bf16.mxu0 0
        %1090 = vmatpush1.bf16.msra.mxu0 %v1048
        %1091 = vmatprep.subr.bf16.mxu0 0
        %1092 = vmatpush1.bf16.msra.mxu0 %v1049
        %1093 = vmatprep.subr.bf16.mxu0 0
        %1094 = vmatpush1.bf16.msra.mxu0 %v1050
        %1095 = vmatprep.subr.bf16.mxu0 0
        %1096 = vmatpush1.bf16.msra.mxu0 %v1051
        %1097 = vmatprep.subr.bf16.mxu0 0
        %1098 = vmatpush1.bf16.msra.mxu0 %v1052
        %1099 = vmatprep.subr.bf16.mxu0 0
        %1100 = vmatpush1.bf16.msra.mxu0 %v1053
        %1101 = vmatprep.subr.bf16.mxu0 0
        %1102 = vmatpush1.bf16.msra.mxu0 %v1054
        %1103 = vmatprep.mubr.bf16.mxu0 %v942
        %1104 = vmatmul.mubr.bf16.gmra.mrb[0].mxu0 %v941
        %v1105 = vpop.f32.mrb[0].mxu0
        %v1106 = vadd.f32 0.0, %v1105
        %v1107 = vpop.f32.mrb[0].mxu0
        %v1108 = vpop.f32.mrb[0].mxu0
        %v1109 = vadd.f32 0.0, %v1108
        %v1110 = vpop.f32.mrb[0].mxu0
        %1111 = vdwg.mxu0
        %v1144 = vunpack.c.l.b16 %v718
        %v1145 = vunpack.c.l.b16 %v719
        %v1146 = vunpack.c.l.b16 %v720
        %v1147 = vunpack.c.l.b16 %v721
        %v1148 = vunpack.c.l.b16 %v722
        %v1149 = vunpack.c.l.b16 %v723
        %v1150 = vunpack.c.l.b16 %v724
        %v1151 = vunpack.c.l.b16 %v725
        %v1152 = vunpack.c.l.b16 %v726
        %v1153 = vunpack.c.l.b16 %v727
        %v1154 = vunpack.c.l.b16 %v728
        %v1155 = vunpack.c.l.b16 %v729
        %v1156 = vunpack.c.l.b16 %v730
        %v1157 = vunpack.c.l.b16 %v731
        %v1158 = vunpack.c.l.b16 %v732
        %v1159 = vunpack.c.l.b16 %v733
        %v1160 = vunpack.c.l.b16 %v734
        %v1161 = vunpack.c.l.b16 %v735
        %v1162 = vunpack.c.l.b16 %v736
        %v1163 = vunpack.c.l.b16 %v737
        %v1164 = vunpack.c.l.b16 %v738
        %v1165 = vunpack.c.l.b16 %v739
        %v1166 = vunpack.c.l.b16 %v740
        %v1167 = vunpack.c.l.b16 %v741
        %v1168 = vunpack.c.l.b16 %v742
        %v1169 = vunpack.c.l.b16 %v743
        %v1170 = vunpack.c.l.b16 %v744
        %v1171 = vunpack.c.l.b16 %v745
        %v1172 = vunpack.c.l.b16 %v746
        %v1173 = vunpack.c.l.b16 %v747
        %v1174 = vunpack.c.l.b16 %v748
        %v1175 = vunpack.c.l.b16 %v749
        %v1176 = vpack.c.b16 %v1145, %v1144
        %v1177 = vpack.c.b16 %v1147, %v1146
        %v1178 = vpack.c.b16 %v1149, %v1148
        %v1179 = vpack.c.b16 %v1151, %v1150
        %v1180 = vpack.c.b16 %v1153, %v1152
        %v1181 = vpack.c.b16 %v1155, %v1154
        %v1182 = vpack.c.b16 %v1157, %v1156
        %v1183 = vpack.c.b16 %v1159, %v1158
        %v1184 = vpack.c.b16 %v1161, %v1160
        %v1185 = vpack.c.b16 %v1163, %v1162
        %v1186 = vpack.c.b16 %v1165, %v1164
        %v1187 = vpack.c.b16 %v1167, %v1166
        %v1188 = vpack.c.b16 %v1169, %v1168
        %v1189 = vpack.c.b16 %v1171, %v1170
        %v1190 = vpack.c.b16 %v1173, %v1172
        %v1191 = vpack.c.b16 %v1175, %v1174
        %1208 = vmatprep.subr.bf16.mxu0 0
        %1209 = vmatpush1.bf16.msra.mxu0 %v1176
        %1210 = vmatprep.subr.bf16.mxu0 0
        %1211 = vmatpush1.bf16.msra.mxu0 %v1177
        %1212 = vmatprep.subr.bf16.mxu0 0
        %1213 = vmatpush1.bf16.msra.mxu0 %v1178
        %1214 = vmatprep.subr.bf16.mxu0 0
        %1215 = vmatpush1.bf16.msra.mxu0 %v1179
        %1216 = vmatprep.subr.bf16.mxu0 0
        %1217 = vmatpush1.bf16.msra.mxu0 %v1180
        %1218 = vmatprep.subr.bf16.mxu0 0
        %1219 = vmatpush1.bf16.msra.mxu0 %v1181
        %1220 = vmatprep.subr.bf16.mxu0 0
        %1221 = vmatpush1.bf16.msra.mxu0 %v1182
        %1222 = vmatprep.subr.bf16.mxu0 0
        %1223 = vmatpush1.bf16.msra.mxu0 %v1183
        %1224 = vmatprep.subr.bf16.mxu0 0
        %1225 = vmatpush1.bf16.msra.mxu0 %v1184
        %1226 = vmatprep.subr.bf16.mxu0 0
        %1227 = vmatpush1.bf16.msra.mxu0 %v1185
        %1228 = vmatprep.subr.bf16.mxu0 0
        %1229 = vmatpush1.bf16.msra.mxu0 %v1186
        %1230 = vmatprep.subr.bf16.mxu0 0
        %1231 = vmatpush1.bf16.msra.mxu0 %v1187
        %1232 = vmatprep.subr.bf16.mxu0 0
        %1233 = vmatpush1.bf16.msra.mxu0 %v1188
        %1234 = vmatprep.subr.bf16.mxu0 0
        %1235 = vmatpush1.bf16.msra.mxu0 %v1189
        %1236 = vmatprep.subr.bf16.mxu0 0
        %1237 = vmatpush1.bf16.msra.mxu0 %v1190
        %1238 = vmatprep.subr.bf16.mxu0 0
        %1239 = vmatpush1.bf16.msra.mxu0 %v1191
        %1240 = vmatprep.mubr.bf16.mxu0 %v717
        %1241 = vmatmul.mubr.bf16.gmra.mrb[0].mxu0 %v716
        %v1242 = vpop.f32.mrb[0].mxu0
        %v1243 = vadd.f32 %v1106, %v1242
        %v1244 = vpop.f32.mrb[0].mxu0
        %v1245 = vpop.f32.mrb[0].mxu0
        %v1246 = vadd.f32 %v1109, %v1245
        %v1247 = vpop.f32.mrb[0].mxu0
        %1248 = vdwg.mxu0
        %v1249 = vld [vmem:[%s5] sm:$0x1]
        %v1251 = vlaneseq
        %v1252 = vshrl.u32 %v1251, 7
        %v1253 = vsub.s32 0, %v1252
        %v1254 = vrot.slane %v1249, %v1253
        %v1256 = vadd.f32 %v1243, %v1254
        %v1257 = vadd.f32 %v1246, %v1254
        %1258 = vst [vmem:[%s327] sm:$0xff] %v1256
        %1259 = vst [vmem:[%s327 + $0x8] sm:$0xff] %v1257
        %p1260 = scmp.lt.s32.totalorder %s22, 1
        %s1261 = scalar_select %p1260, %s22, 1
        %s1262 = smul.addr %s1261, 2
        %s1263 = smul.addr %s1262, 8
        %s1264 = scalar_lea.vmem %s6, %s1263
        // Predicated region
        $region65: #{simple_rebuild_fc_forward.1} parent=43 // pred_check
          %p1265 = pneg %p171
        $region66: #{simple_rebuild_fc_forward.1} parent=43 // pred_check_branch
          %1267 = sbr.rel (%p1265) target = $region68
        $region67: #{simple_rebuild_fc_forward.1} parent=43 // pred_region
          _
        $region68: #{simple_rebuild_fc_forward.1} parent=43 // pred_fallthru
          _
      $region44: #{simple_rebuild_fc_forward.1} parent=5 // pred_fallthru
        _
      %p1268 = scmp.le.s32.totalorder 2, %s17
      // Predicated region
      $region69: #{simple_rebuild_fc_forward.1} parent=5 // pred_check
        %p1269 = pneg %p1268
      $region70: #{simple_rebuild_fc_forward.1} parent=5 // pred_check_branch
        %1271 = sbr.rel (%p1269) target = $region72
      $region71: #{simple_rebuild_fc_forward.1} parent=5 // pred_region
        %s1272 = ssub.s32 %s17, 2
        // Predicated region
        $region73: #{simple_rebuild_fc_forward.1} parent=71 // pred_check
          %p1273 = pneg %p177
        $region74: #{simple_rebuild_fc_forward.1} parent=71 // pred_check_branch
          %1275 = sbr.rel (%p1273) target = $region76
        $region75: #{simple_rebuild_fc_forward.1} parent=71 // pred_region
          %p1276 = scmp.lt.s32.totalorder %s23, 1
          %s1277 = scalar_select %p1276, %s23, 1
          %s1278 = smul.addr %s1277, 2
          %s1279 = smul.addr %s1278, 8
          %s1280 = scalar_lea.vmem %s6, %s1279
        $region76: #{simple_rebuild_fc_forward.1} parent=71 // pred_fallthru
          _
      $region72: #{simple_rebuild_fc_forward.1} parent=5 // pred_fallthru
        _
    $region6: #{simple_rebuild_fc_forward.1} parent=1 // loop_footer
      %s21 = sadd.s32 1, %s17
    $region7: #{simple_rebuild_fc_forward.1} parent=1 // loop_footer_branch
      %16 = sbr.rel target = $region3
    $region8: #{simple_rebuild_fc_forward.1} parent=1 // loop_exit
      _
    %1281 = vsyncpa [#allocation3], 1
    %s1282 = scalar_lea.sflag [#allocation3], 1
    %1283 = vsyncpa %s1282, 1
    %1284 = vsyncpa [#allocation5], 1
    %1285 = vsyncpa [#allocation8], 1

</llo_original>
